<compile_context>
chip_gen: v7x
topology: tpu7x:2x2x1
jax: 0.10.0
libtpu: 0.0.40
codegen_flags: <defaults>
</compile_context>

<pallas_src>
import functools
import math

import jax
import jax.numpy as jnp
import numpy as np
from jax.experimental import pallas as pl
from jax.experimental.pallas import tpu as pltpu

LANE = 128
SUBLANE = 8
MAX_TILE_B = 1024  # per review: 512-1024 row tiles reach ~85% of HBM roofline


def _cdiv(a: int, b: int) -> int:
    return -(-a // b)


def _round_up(x: int, m: int) -> int:
    return _cdiv(x, m) * m


def _pad_to(arr: jax.Array, shape) -> jax.Array:
    pads = [(0, t - s) for s, t in zip(arr.shape, shape)]
    return jnp.pad(arr, pads)


def _vmem_capacity_bytes() -> int:
    """Per-core VMEM capacity; conservative fallback if the query fails."""
    try:
        return int(pltpu.get_tpu_info().vmem_capacity_bytes)
    except Exception:
        return 64 << 20  # v7x per-TC physical VMEM (smallest of v5e/v6e/v7x)


# ---------------------------------------------------------------------------
# Fused Pallas kernel: full encoder+decoder stack in one kernel body.
# refs = (x_ref, w0, b0, w1, b1, ..., wL-1, bL-1, o_ref)
# ---------------------------------------------------------------------------
def _sdae_fused_kernel(*refs, relu_flags, compute_dtype):
    x_ref = refs[0]
    o_ref = refs[-1]
    wb_refs = refs[1:-1]

    # TODO(synk): if bundle dumps show vld/vst spill traffic saturating the
    # load/store slots at tile_b=1024 (6 chained f32 activations), split the
    # batch tile into 256-row sub-chunks with lax.fori_loop(..., unroll=True)
    # over the full layer chain.
    h = x_ref[...].astype(jnp.float32)
    for layer_idx, relu in enumerate(relu_flags):
        w = wb_refs[2 * layer_idx][...]
        b = wb_refs[2 * layer_idx + 1][...]
        h = jnp.dot(h.astype(compute_dtype), w,
                    preferred_element_type=jnp.float32)
        h = h + b.astype(jnp.float32)
        if relu:
            h = jnp.maximum(h, 0.0)
    o_ref[...] = h.astype(o_ref.dtype)


# ---------------------------------------------------------------------------
# Wrapper: derive batch tile from VMEM budget, build BlockSpecs, call kernel.
# ---------------------------------------------------------------------------
def sdae_forward(x, weights, biases, relu_flags, out_dim,
                 single_buffer_params=True):
    """x: (B, D0) f32.  weights[i]: (P_in_i, P_out_i) padded, transposed.
    biases[i]: (1, P_out_i) f32.  relu_flags: static tuple of bool.
    out_dim: static int (logical output feature count).
    single_buffer_params: static bool -> pipeline_mode=pl.Buffered(1) on
    grid-invariant parameter blocks (halves their VMEM footprint)."""
    B, D0 = x.shape
    k0 = weights[0].shape[0]          # padded in-dim of first layer
    p_last = weights[-1].shape[1]     # padded out-dim of last layer (lane-dense)
    widest = max(w.shape[1] for w in weights)
    assert D0 <= k0

    # ---- VMEM footprint accounting (includes buffering factors) ----------
    param_buf = 1 if single_buffer_params else 2
    param_bytes = (sum(int(w.size) * w.dtype.itemsize for w in weights)
                   + sum(int(b.size) * b.dtype.itemsize for b in biases))

    def footprint(tile_b):
        # double-buffered x/out tiles + resident params + f32 intermediates
        # (running activation + dot output + bias/relu temp) at the widest layer.
        io = 2 * tile_b * (k0 * x.dtype.itemsize + p_last * x.dtype.itemsize)
        act = 3 * tile_b * widest * 4
        return param_buf * param_bytes + io + act

    vmem_cap = _vmem_capacity_bytes()
    vmem_budget = (vmem_cap * 3) // 4   # headroom for compiler temporaries

    # ---- Batch tile: as large as the budget allows, capped at 1024 rows. --
    padded_b = _round_up(B, SUBLANE)
    n_tiles = max(1, _cdiv(padded_b, MAX_TILE_B))
    if n_tiles == 1 and padded_b >= 2 * SUBLANE:
        # Keep grid >= 2 when the batch allows it so the "parallel" axis can
        # shard across v7x's two TensorCores (and the pipeline has >1 step).
        n_tiles = 2
    while True:
        tile_b = _round_up(_cdiv(padded_b, n_tiles), SUBLANE)
        vmem_need = footprint(tile_b)
        if vmem_need <= vmem_budget or tile_b <= SUBLANE:
            break
        n_tiles *= 2
    if vmem_need > vmem_budget:
        # TODO(synk): for production-scale dims (many thousands of features)
        # tile the weights along Din/Dout with an f32 accumulator scratch
        # instead of full-block residency.
        raise ValueError(
            f"SDAE parameters ({param_bytes/2**20:.1f} MiB x{param_buf}) do not "
            f"fit the VMEM budget ({vmem_budget/2**20:.1f} MiB); tile the weights.")

    pb = tile_b * n_tiles
    vmem_limit = int(min(max(2 * vmem_need, 32 << 20), vmem_budget))

    x_p = x if (pb, k0) == (B, D0) else _pad_to(x, (pb, k0))

    # ---- BlockSpecs --------------------------------------------------------
    param_spec_kwargs = (
        dict(pipeline_mode=pl.Buffered(1)) if single_buffer_params else {})
    in_specs = [pl.BlockSpec((tile_b, k0), lambda i: (i, 0))]
    wb_inputs = []
    for w, b in zip(weights, biases):
        pin, pout = w.shape
        in_specs.append(
            pl.BlockSpec((pin, pout), lambda i: (0, 0), **param_spec_kwargs))
        in_specs.append(
            pl.BlockSpec((1, pout), lambda i: (0, 0), **param_spec_kwargs))
        wb_inputs.append(w)
        wb_inputs.append(b)

    kernel = functools.partial(
        _sdae_fused_kernel,
        relu_flags=tuple(relu_flags),
        compute_dtype=weights[0].dtype,
    )

    out_p = pl.pallas_call(
        kernel,
        out_shape=jax.ShapeDtypeStruct((pb, p_last), x.dtype),
        grid_spec=pl.GridSpec(
            grid=(pb // tile_b,),
            in_specs=in_specs,
            out_specs=pl.BlockSpec((tile_b, p_last), lambda i: (i, 0)),
        ),
        compiler_params=pltpu.CompilerParams(
            dimension_semantics=("parallel",),     # batch axis -> both TCs
            vmem_limit_bytes=vmem_limit,
        ),
    )(x_p, *wb_inputs)

    return out_p[:B, :out_dim]


# ---------------------------------------------------------------------------
# Parameter construction (mirrors PyTorch module __init__), padded for TPU.
# ---------------------------------------------------------------------------
def build_sdae_params(dimensions, key, gain, param_dtype=jnp.float32,
                      out_lane_multiple=LANE):
    """Returns (weights, biases, relu_flags, logical_pairs) for the fused stack.

    Weights stored transposed (in, out).  First-layer in-dim is padded only to
    the sublane packing (8 for f32, 16 for bf16); every out-dim is padded
    lane-dense (multiple of 128; pass out_lane_multiple=256 for production
    layer widths >128 on v6e/v7x).  Biases are f32, zero-padded.
    param_dtype=jnp.bfloat16 enables the bf16 MXU path (f32 accumulation is
    kept either way)."""
    # Encoder: dims[0]->...->dims[-2] with ReLU, then dims[-2]->dims[-1] no activation.
    enc_pairs = list(zip(dimensions[:-2], dimensions[1:-1]))
    enc_acts = [True] * len(enc_pairs)
    enc_pairs.append((dimensions[-2], dimensions[-1]))
    enc_acts.append(False)

    # Decoder: reversed(dims[1:]) chain with ReLU, then dims[1]->dims[0] with final ReLU.
    rev = list(reversed(dimensions[1:]))
    dec_pairs = list(zip(rev[:-1], rev[1:]))
    dec_acts = [True] * len(dec_pairs)
    dec_pairs.append((dimensions[1], dimensions[0]))
    dec_acts.append(True)  # final_activation = ReLU

    pairs = enc_pairs + dec_pairs
    acts = enc_acts + dec_acts

    in_align = 16 if param_dtype == jnp.bfloat16 else 8  # sublane packing

    def pad_out(d):
        return _round_up(d, LANE if d <= LANE else out_lane_multiple)

    keys = jax.random.split(key, len(pairs))
    weights, biases = [], []
    prev_pout = None
    for idx, ((din, dout), k) in enumerate(zip(pairs, keys)):
        # torch.nn.init.xavier_uniform_ on (out, in): bound = gain*sqrt(6/(in+out)).
        bound = gain * math.sqrt(6.0 / (din + dout))
        w_t = jax.random.uniform(k, (din, dout), jnp.float32, -bound, bound)
        pin = _round_up(din, in_align) if idx == 0 else prev_pout
        pout = pad_out(dout)
        weights.append(_pad_to(w_t, (pin, pout)).astype(param_dtype))
        biases.append(jnp.zeros((1, pout), dtype=jnp.float32))  # nn.init.constant_(bias, 0)
        prev_pout = pout
    return tuple(weights), tuple(biases), tuple(acts), tuple(pairs)


# ---------------------------------------------------------------------------
# Pure-JAX reference (logical, unpadded slices of the same params; mirrors the
# kernel's dtype behaviour: operands cast to param dtype, f32 accumulation).
# ---------------------------------------------------------------------------
def sdae_reference(x, weights, biases, relu_flags, pairs):
    compute_dtype = weights[0].dtype
    h = x.astype(jnp.float32)
    for w, b, relu, (din, dout) in zip(weights, biases, relu_flags, pairs):
        wl = w[:din, :dout]
        bl = b[:, :dout].astype(jnp.float32)
        h = jnp.dot(h.astype(compute_dtype), wl,
                    preferred_element_type=jnp.float32) + bl
        if relu:
            h = jnp.maximum(h, 0.0)
    return h


# ---------------------------------------------------------------------------
if __name__ == "__main__":
    # Small, forward-consistent shapes: SDAE dims [32, 16, 16, 8], batch 8.
    dimensions = [32, 16, 16, 8]
    batch = 8
    gain = math.sqrt(2.0)  # nn.init.calculate_gain('relu')

    key = jax.random.PRNGKey(0)
    k_params, k_input = jax.random.split(key)
    x = jax.random.normal(k_input, (batch, dimensions[0]), dtype=jnp.float32)

    fwd = jax.jit(sdae_forward, static_argnums=(3, 4, 5))

    def run(weights, biases, relu_flags, out_dim):
        try:
            return jax.block_until_ready(
                fwd(x, weights, biases, relu_flags, out_dim, True))
        except Exception:
            # pl.Buffered(1) not accepted by this jax build -> default buffering.
            return jax.block_until_ready(
                fwd(x, weights, biases, relu_flags, out_dim, False))

    # f32 parameter/compute path (tight tolerance).
    w32, b32, relu_flags, pairs = build_sdae_params(
        dimensions, k_params, gain, param_dtype=jnp.float32)
    out32 = run(w32, b32, relu_flags, dimensions[0])
    assert out32.shape == (batch, dimensions[0]), out32.shape
    assert out32.dtype == jnp.float32
    assert bool(jnp.all(out32 >= 0.0))  # final activation is ReLU
    ref32 = sdae_reference(x, w32, b32, relu_flags, pairs)
    np.testing.assert_allclose(np.asarray(out32), np.asarray(ref32),
                               rtol=1e-5, atol=1e-5)

    # bf16 weights / bf16 MXU operands, f32 accumulation (relaxed tolerance:
    # inter-layer activations are quantized to bf16 in both kernel and ref).
    w16, b16, relu_flags16, pairs16 = build_sdae_params(
        dimensions, k_params, gain, param_dtype=jnp.bfloat16)
    out16 = run(w16, b16, relu_flags16, dimensions[0])
    ref16 = sdae_reference(x, w16, b16, relu_flags16, pairs16)
    np.testing.assert_allclose(np.asarray(out16), np.asarray(ref16),
                               rtol=2e-2, atol=2e-2)

    print("KERNEL_OK")
</pallas_src>

<mosaic_0001>
module attributes {stable_mosaic.version = 11 : i64} {
  func.func @_sdae_fused_kernel(%arg0: i32, %arg1: memref<8x32xf32, #tpu.memory_space<vmem>>, %arg2: memref<32x128xf32, #tpu.memory_space<vmem>>, %arg3: memref<1x128xf32, #tpu.memory_space<vmem>>, %arg4: memref<128x128xf32, #tpu.memory_space<vmem>>, %arg5: memref<1x128xf32, #tpu.memory_space<vmem>>, %arg6: memref<128x128xf32, #tpu.memory_space<vmem>>, %arg7: memref<1x128xf32, #tpu.memory_space<vmem>>, %arg8: memref<128x128xf32, #tpu.memory_space<vmem>>, %arg9: memref<1x128xf32, #tpu.memory_space<vmem>>, %arg10: memref<128x128xf32, #tpu.memory_space<vmem>>, %arg11: memref<1x128xf32, #tpu.memory_space<vmem>>, %arg12: memref<128x128xf32, #tpu.memory_space<vmem>>, %arg13: memref<1x128xf32, #tpu.memory_space<vmem>>, %arg14: memref<8x128xf32, #tpu.memory_space<vmem>>) attributes {dimension_semantics = [#tpu.dimension_semantics<parallel>], iteration_bounds = array<i64: 1>, scalar_prefetch = 0 : i64, scratch_operands = 0 : i64, tpu.core_type = #tpu.core_type<tc>, window_params = [{transform_indices = @transform_0, window_bounds = array<i64: 8, 32>}, {pipeline_mode = #tpu.pipeline_mode<synchronous>, transform_indices = @transform_1, window_bounds = array<i64: 32, 128>}, {pipeline_mode = #tpu.pipeline_mode<synchronous>, transform_indices = @transform_2, window_bounds = array<i64: 1, 128>}, {pipeline_mode = #tpu.pipeline_mode<synchronous>, transform_indices = @transform_3, window_bounds = array<i64: 128, 128>}, {pipeline_mode = #tpu.pipeline_mode<synchronous>, transform_indices = @transform_4, window_bounds = array<i64: 1, 128>}, {pipeline_mode = #tpu.pipeline_mode<synchronous>, transform_indices = @transform_5, window_bounds = array<i64: 128, 128>}, {pipeline_mode = #tpu.pipeline_mode<synchronous>, transform_indices = @transform_6, window_bounds = array<i64: 1, 128>}, {pipeline_mode = #tpu.pipeline_mode<synchronous>, transform_indices = @transform_7, window_bounds = array<i64: 128, 128>}, {pipeline_mode = #tpu.pipeline_mode<synchronous>, transform_indices = @transform_8, window_bounds = array<i64: 1, 128>}, {pipeline_mode = #tpu.pipeline_mode<synchronous>, transform_indices = @transform_9, window_bounds = array<i64: 128, 128>}, {pipeline_mode = #tpu.pipeline_mode<synchronous>, transform_indices = @transform_10, window_bounds = array<i64: 1, 128>}, {pipeline_mode = #tpu.pipeline_mode<synchronous>, transform_indices = @transform_11, window_bounds = array<i64: 128, 128>}, {pipeline_mode = #tpu.pipeline_mode<synchronous>, transform_indices = @transform_12, window_bounds = array<i64: 1, 128>}, {transform_indices = @transform_13, window_bounds = array<i64: 8, 128>}]} {
    %c0 = arith.constant 0 : index
    %c0_0 = arith.constant 0 : index
    %0 = vector.load %arg1[%c0, %c0_0] : memref<8x32xf32, #tpu.memory_space<vmem>>, vector<8x32xf32>
    %c0_1 = arith.constant 0 : index
    %c0_2 = arith.constant 0 : index
    %1 = vector.load %arg2[%c0_1, %c0_2] : memref<32x128xf32, #tpu.memory_space<vmem>>, vector<32x128xf32>
    %c0_3 = arith.constant 0 : index
    %c0_4 = arith.constant 0 : index
    %2 = vector.load %arg3[%c0_3, %c0_4] : memref<1x128xf32, #tpu.memory_space<vmem>>, vector<1x128xf32>
    %cst = arith.constant dense<0.000000e+00> : vector<8x128xf32>
    %3 = tpu.matmul %0, %1, %cst {dimension_numbers = #tpu.dot_dimension_numbers<[1], [0], [0], [1], [0, 0, 1, 1], [], []>} : vector<8x32xf32>, vector<32x128xf32>, vector<8x128xf32> -> vector<8x128xf32>
    %4 = vector.broadcast %2 : vector<1x128xf32> to vector<8x128xf32>
    %5 = arith.addf %3, %4 : vector<8x128xf32>
    %cst_5 = arith.constant 0.000000e+00 : f32
    %6 = vector.broadcast %cst_5 : f32 to vector<8x128xf32>
    %7 = arith.maximumf %5, %6 : vector<8x128xf32>
    %c0_6 = arith.constant 0 : index
    %c0_7 = arith.constant 0 : index
    %8 = vector.load %arg4[%c0_6, %c0_7] : memref<128x128xf32, #tpu.memory_space<vmem>>, vector<128x128xf32>
    %c0_8 = arith.constant 0 : index
    %c0_9 = arith.constant 0 : index
    %9 = vector.load %arg5[%c0_8, %c0_9] : memref<1x128xf32, #tpu.memory_space<vmem>>, vector<1x128xf32>
    %cst_10 = arith.constant dense<0.000000e+00> : vector<8x128xf32>
    %10 = tpu.matmul %7, %8, %cst_10 {dimension_numbers = #tpu.dot_dimension_numbers<[1], [0], [0], [1], [0, 0, 1, 1], [], []>} : vector<8x128xf32>, vector<128x128xf32>, vector<8x128xf32> -> vector<8x128xf32>
    %11 = vector.broadcast %9 : vector<1x128xf32> to vector<8x128xf32>
    %12 = arith.addf %10, %11 : vector<8x128xf32>
    %cst_11 = arith.constant 0.000000e+00 : f32
    %13 = vector.broadcast %cst_11 : f32 to vector<8x128xf32>
    %14 = arith.maximumf %12, %13 : vector<8x128xf32>
    %c0_12 = arith.constant 0 : index
    %c0_13 = arith.constant 0 : index
    %15 = vector.load %arg6[%c0_12, %c0_13] : memref<128x128xf32, #tpu.memory_space<vmem>>, vector<128x128xf32>
    %c0_14 = arith.constant 0 : index
    %c0_15 = arith.constant 0 : index
    %16 = vector.load %arg7[%c0_14, %c0_15] : memref<1x128xf32, #tpu.memory_space<vmem>>, vector<1x128xf32>
    %cst_16 = arith.constant dense<0.000000e+00> : vector<8x128xf32>
    %17 = tpu.matmul %14, %15, %cst_16 {dimension_numbers = #tpu.dot_dimension_numbers<[1], [0], [0], [1], [0, 0, 1, 1], [], []>} : vector<8x128xf32>, vector<128x128xf32>, vector<8x128xf32> -> vector<8x128xf32>
    %18 = vector.broadcast %16 : vector<1x128xf32> to vector<8x128xf32>
    %19 = arith.addf %17, %18 : vector<8x128xf32>
    %c0_17 = arith.constant 0 : index
    %c0_18 = arith.constant 0 : index
    %20 = vector.load %arg8[%c0_17, %c0_18] : memref<128x128xf32, #tpu.memory_space<vmem>>, vector<128x128xf32>
    %c0_19 = arith.constant 0 : index
    %c0_20 = arith.constant 0 : index
    %21 = vector.load %arg9[%c0_19, %c0_20] : memref<1x128xf32, #tpu.memory_space<vmem>>, vector<1x128xf32>
    %cst_21 = arith.constant dense<0.000000e+00> : vector<8x128xf32>
    %22 = tpu.matmul %19, %20, %cst_21 {dimension_numbers = #tpu.dot_dimension_numbers<[1], [0], [0], [1], [0, 0, 1, 1], [], []>} : vector<8x128xf32>, vector<128x128xf32>, vector<8x128xf32> -> vector<8x128xf32>
    %23 = vector.broadcast %21 : vector<1x128xf32> to vector<8x128xf32>
    %24 = arith.addf %22, %23 : vector<8x128xf32>
    %cst_22 = arith.constant 0.000000e+00 : f32
    %25 = vector.broadcast %cst_22 : f32 to vector<8x128xf32>
    %26 = arith.maximumf %24, %25 : vector<8x128xf32>
    %c0_23 = arith.constant 0 : index
    %c0_24 = arith.constant 0 : index
    %27 = vector.load %arg10[%c0_23, %c0_24] : memref<128x128xf32, #tpu.memory_space<vmem>>, vector<128x128xf32>
    %c0_25 = arith.constant 0 : index
    %c0_26 = arith.constant 0 : index
    %28 = vector.load %arg11[%c0_25, %c0_26] : memref<1x128xf32, #tpu.memory_space<vmem>>, vector<1x128xf32>
    %cst_27 = arith.constant dense<0.000000e+00> : vector<8x128xf32>
    %29 = tpu.matmul %26, %27, %cst_27 {dimension_numbers = #tpu.dot_dimension_numbers<[1], [0], [0], [1], [0, 0, 1, 1], [], []>} : vector<8x128xf32>, vector<128x128xf32>, vector<8x128xf32> -> vector<8x128xf32>
    %30 = vector.broadcast %28 : vector<1x128xf32> to vector<8x128xf32>
    %31 = arith.addf %29, %30 : vector<8x128xf32>
    %cst_28 = arith.constant 0.000000e+00 : f32
    %32 = vector.broadcast %cst_28 : f32 to vector<8x128xf32>
    %33 = arith.maximumf %31, %32 : vector<8x128xf32>
    %c0_29 = arith.constant 0 : index
    %c0_30 = arith.constant 0 : index
    %34 = vector.load %arg12[%c0_29, %c0_30] : memref<128x128xf32, #tpu.memory_space<vmem>>, vector<128x128xf32>
    %c0_31 = arith.constant 0 : index
    %c0_32 = arith.constant 0 : index
    %35 = vector.load %arg13[%c0_31, %c0_32] : memref<1x128xf32, #tpu.memory_space<vmem>>, vector<1x128xf32>
    %cst_33 = arith.constant dense<0.000000e+00> : vector<8x128xf32>
    %36 = tpu.matmul %33, %34, %cst_33 {dimension_numbers = #tpu.dot_dimension_numbers<[1], [0], [0], [1], [0, 0, 1, 1], [], []>} : vector<8x128xf32>, vector<128x128xf32>, vector<8x128xf32> -> vector<8x128xf32>
    %37 = vector.broadcast %35 : vector<1x128xf32> to vector<8x128xf32>
    %38 = arith.addf %36, %37 : vector<8x128xf32>
    %cst_34 = arith.constant 0.000000e+00 : f32
    %39 = vector.broadcast %cst_34 : f32 to vector<8x128xf32>
    %40 = arith.maximumf %38, %39 : vector<8x128xf32>
    %c0_35 = arith.constant 0 : index
    %c0_36 = arith.constant 0 : index
    %41 = vector.load %arg14[%c0_35, %c0_36] : memref<8x128xf32, #tpu.memory_space<vmem>>, vector<8x128xf32>
    tpu.vector_store %arg14[%c0_35, %c0_36], %40 {strides = array<i32>} : memref<8x128xf32, #tpu.memory_space<vmem>>, vector<8x128xf32>,
    return
  }
  func.func @transform_0(%arg0: i32) -> (i32, i32) {
    %c0_i32 = arith.constant 0 : i32
    %c0_i32_0 = arith.constant 0 : i32
    return %arg0, %c0_i32 : i32, i32
  }
  func.func @transform_1(%arg0: i32) -> (i32, i32) {
    %c0_i32 = arith.constant 0 : i32
    %c0_i32_0 = arith.constant 0 : i32
    %c0_i32_1 = arith.constant 0 : i32
    return %c0_i32, %c0_i32_0 : i32, i32
  }
  func.func @transform_2(%arg0: i32) -> (i32, i32) {
    %c0_i32 = arith.constant 0 : i32
    %c0_i32_0 = arith.constant 0 : i32
    %c0_i32_1 = arith.constant 0 : i32
    return %c0_i32, %c0_i32_0 : i32, i32
  }
  func.func @transform_3(%arg0: i32) -> (i32, i32) {
    %c0_i32 = arith.constant 0 : i32
    %c0_i32_0 = arith.constant 0 : i32
    %c0_i32_1 = arith.constant 0 : i32
    return %c0_i32, %c0_i32_0 : i32, i32
  }
  func.func @transform_4(%arg0: i32) -> (i32, i32) {
    %c0_i32 = arith.constant 0 : i32
    %c0_i32_0 = arith.constant 0 : i32
    %c0_i32_1 = arith.constant 0 : i32
    return %c0_i32, %c0_i32_0 : i32, i32
  }
  func.func @transform_5(%arg0: i32) -> (i32, i32) {
    %c0_i32 = arith.constant 0 : i32
    %c0_i32_0 = arith.constant 0 : i32
    %c0_i32_1 = arith.constant 0 : i32
    return %c0_i32, %c0_i32_0 : i32, i32
  }
  func.func @transform_6(%arg0: i32) -> (i32, i32) {
    %c0_i32 = arith.constant 0 : i32
    %c0_i32_0 = arith.constant 0 : i32
    %c0_i32_1 = arith.constant 0 : i32
    return %c0_i32, %c0_i32_0 : i32, i32
  }
  func.func @transform_7(%arg0: i32) -> (i32, i32) {
    %c0_i32 = arith.constant 0 : i32
    %c0_i32_0 = arith.constant 0 : i32
    %c0_i32_1 = arith.constant 0 : i32
    return %c0_i32, %c0_i32_0 : i32, i32
  }
  func.func @transform_8(%arg0: i32) -> (i32, i32) {
    %c0_i32 = arith.constant 0 : i32
    %c0_i32_0 = arith.constant 0 : i32
    %c0_i32_1 = arith.constant 0 : i32
    return %c0_i32, %c0_i32_0 : i32, i32
  }
  func.func @transform_9(%arg0: i32) -> (i32, i32) {
    %c0_i32 = arith.constant 0 : i32
    %c0_i32_0 = arith.constant 0 : i32
    %c0_i32_1 = arith.constant 0 : i32
    return %c0_i32, %c0_i32_0 : i32, i32
  }
  func.func @transform_10(%arg0: i32) -> (i32, i32) {
    %c0_i32 = arith.constant 0 : i32
    %c0_i32_0 = arith.constant 0 : i32
    %c0_i32_1 = arith.constant 0 : i32
    return %c0_i32, %c0_i32_0 : i32, i32
  }
  func.func @transform_11(%arg0: i32) -> (i32, i32) {
    %c0_i32 = arith.constant 0 : i32
    %c0_i32_0 = arith.constant 0 : i32
    %c0_i32_1 = arith.constant 0 : i32
    return %c0_i32, %c0_i32_0 : i32, i32
  }
  func.func @transform_12(%arg0: i32) -> (i32, i32) {
    %c0_i32 = arith.constant 0 : i32
    %c0_i32_0 = arith.constant 0 : i32
    %c0_i32_1 = arith.constant 0 : i32
    return %c0_i32, %c0_i32_0 : i32, i32
  }
  func.func @transform_13(%arg0: i32) -> (i32, i32) {
    %c0_i32 = arith.constant 0 : i32
    %c0_i32_0 = arith.constant 0 : i32
    return %arg0, %c0_i32 : i32, i32
  }
}

module attributes {stable_mosaic.version = 11 : i64} {
  func.func @_sdae_fused_kernel(%arg0: i32, %arg1: memref<8x32xf32, #tpu.memory_space<vmem>>, %arg2: memref<32x128xf32, #tpu.memory_space<vmem>>, %arg3: memref<1x128xf32, #tpu.memory_space<vmem>>, %arg4: memref<128x128xf32, #tpu.memory_space<vmem>>, %arg5: memref<1x128xf32, #tpu.memory_space<vmem>>, %arg6: memref<128x128xf32, #tpu.memory_space<vmem>>, %arg7: memref<1x128xf32, #tpu.memory_space<vmem>>, %arg8: memref<128x128xf32, #tpu.memory_space<vmem>>, %arg9: memref<1x128xf32, #tpu.memory_space<vmem>>, %arg10: memref<128x128xf32, #tpu.memory_space<vmem>>, %arg11: memref<1x128xf32, #tpu.memory_space<vmem>>, %arg12: memref<128x128xf32, #tpu.memory_space<vmem>>, %arg13: memref<1x128xf32, #tpu.memory_space<vmem>>, %arg14: memref<8x128xf32, #tpu.memory_space<vmem>>) attributes {dimension_semantics = [#tpu.dimension_semantics<parallel>], iteration_bounds = array<i64: 1>, scalar_prefetch = 0 : i64, scratch_operands = 0 : i64, tpu.core_type = #tpu.core_type<tc>, window_params = [{transform_indices = @transform_0, window_bounds = array<i64: 8, 32>}, {pipeline_mode = #tpu.pipeline_mode<synchronous>, transform_indices = @transform_1, window_bounds = array<i64: 32, 128>}, {pipeline_mode = #tpu.pipeline_mode<synchronous>, transform_indices = @transform_2, window_bounds = array<i64: 1, 128>}, {pipeline_mode = #tpu.pipeline_mode<synchronous>, transform_indices = @transform_3, window_bounds = array<i64: 128, 128>}, {pipeline_mode = #tpu.pipeline_mode<synchronous>, transform_indices = @transform_4, window_bounds = array<i64: 1, 128>}, {pipeline_mode = #tpu.pipeline_mode<synchronous>, transform_indices = @transform_5, window_bounds = array<i64: 128, 128>}, {pipeline_mode = #tpu.pipeline_mode<synchronous>, transform_indices = @transform_6, window_bounds = array<i64: 1, 128>}, {pipeline_mode = #tpu.pipeline_mode<synchronous>, transform_indices = @transform_7, window_bounds = array<i64: 128, 128>}, {pipeline_mode = #tpu.pipeline_mode<synchronous>, transform_indices = @transform_8, window_bounds = array<i64: 1, 128>}, {pipeline_mode = #tpu.pipeline_mode<synchronous>, transform_indices = @transform_9, window_bounds = array<i64: 128, 128>}, {pipeline_mode = #tpu.pipeline_mode<synchronous>, transform_indices = @transform_10, window_bounds = array<i64: 1, 128>}, {pipeline_mode = #tpu.pipeline_mode<synchronous>, transform_indices = @transform_11, window_bounds = array<i64: 128, 128>}, {pipeline_mode = #tpu.pipeline_mode<synchronous>, transform_indices = @transform_12, window_bounds = array<i64: 1, 128>}, {transform_indices = @transform_13, window_bounds = array<i64: 8, 128>}]} {
    %c0 = arith.constant 0 : index
    %c0_0 = arith.constant 0 : index
    %0 = vector.load %arg1[%c0, %c0_0] : memref<8x32xf32, #tpu.memory_space<vmem>>, vector<8x32xf32>
    %c0_1 = arith.constant 0 : index
    %c0_2 = arith.constant 0 : index
    %1 = vector.load %arg2[%c0_1, %c0_2] : memref<32x128xf32, #tpu.memory_space<vmem>>, vector<32x128xf32>
    %c0_3 = arith.constant 0 : index
    %c0_4 = arith.constant 0 : index
    %2 = vector.load %arg3[%c0_3, %c0_4] : memref<1x128xf32, #tpu.memory_space<vmem>>, vector<1x128xf32>
    %cst = arith.constant dense<0.000000e+00> : vector<8x128xf32>
    %3 = tpu.matmul %0, %1, %cst {dimension_numbers = #tpu.dot_dimension_numbers<[1], [0], [0], [1], [0, 0, 1, 1], [], []>} : vector<8x32xf32>, vector<32x128xf32>, vector<8x128xf32> -> vector<8x128xf32>
    %4 = vector.broadcast %2 : vector<1x128xf32> to vector<8x128xf32>
    %5 = arith.addf %3, %4 : vector<8x128xf32>
    %cst_5 = arith.constant 0.000000e+00 : f32
    %6 = vector.broadcast %cst_5 : f32 to vector<8x128xf32>
    %7 = arith.maximumf %5, %6 : vector<8x128xf32>
    %c0_6 = arith.constant 0 : index
    %c0_7 = arith.constant 0 : index
    %8 = vector.load %arg4[%c0_6, %c0_7] : memref<128x128xf32, #tpu.memory_space<vmem>>, vector<128x128xf32>
    %c0_8 = arith.constant 0 : index
    %c0_9 = arith.constant 0 : index
    %9 = vector.load %arg5[%c0_8, %c0_9] : memref<1x128xf32, #tpu.memory_space<vmem>>, vector<1x128xf32>
    %cst_10 = arith.constant dense<0.000000e+00> : vector<8x128xf32>
    %10 = tpu.matmul %7, %8, %cst_10 {dimension_numbers = #tpu.dot_dimension_numbers<[1], [0], [0], [1], [0, 0, 1, 1], [], []>} : vector<8x128xf32>, vector<128x128xf32>, vector<8x128xf32> -> vector<8x128xf32>
    %11 = vector.broadcast %9 : vector<1x128xf32> to vector<8x128xf32>
    %12 = arith.addf %10, %11 : vector<8x128xf32>
    %cst_11 = arith.constant 0.000000e+00 : f32
    %13 = vector.broadcast %cst_11 : f32 to vector<8x128xf32>
    %14 = arith.maximumf %12, %13 : vector<8x128xf32>
    %c0_12 = arith.constant 0 : index
    %c0_13 = arith.constant 0 : index
    %15 = vector.load %arg6[%c0_12, %c0_13] : memref<128x128xf32, #tpu.memory_space<vmem>>, vector<128x128xf32>
    %c0_14 = arith.constant 0 : index
    %c0_15 = arith.constant 0 : index
    %16 = vector.load %arg7[%c0_14, %c0_15] : memref<1x128xf32, #tpu.memory_space<vmem>>, vector<1x128xf32>
    %cst_16 = arith.constant dense<0.000000e+00> : vector<8x128xf32>
    %17 = tpu.matmul %14, %15, %cst_16 {dimension_numbers = #tpu.dot_dimension_numbers<[1], [0], [0], [1], [0, 0, 1, 1], [], []>} : vector<8x128xf32>, vector<128x128xf32>, vector<8x128xf32> -> vector<8x128xf32>
    %18 = vector.broadcast %16 : vector<1x128xf32> to vector<8x128xf32>
    %19 = arith.addf %17, %18 : vector<8x128xf32>
    %c0_17 = arith.constant 0 : index
    %c0_18 = arith.constant 0 : index
    %20 = vector.load %arg8[%c0_17, %c0_18] : memref<128x128xf32, #tpu.memory_space<vmem>>, vector<128x128xf32>
    %c0_19 = arith.constant 0 : index
    %c0_20 = arith.constant 0 : index
    %21 = vector.load %arg9[%c0_19, %c0_20] : memref<1x128xf32, #tpu.memory_space<vmem>>, vector<1x128xf32>
    %cst_21 = arith.constant dense<0.000000e+00> : vector<8x128xf32>
    %22 = tpu.matmul %19, %20, %cst_21 {dimension_numbers = #tpu.dot_dimension_numbers<[1], [0], [0], [1], [0, 0, 1, 1], [], []>} : vector<8x128xf32>, vector<128x128xf32>, vector<8x128xf32> -> vector<8x128xf32>
    %23 = vector.broadcast %21 : vector<1x128xf32> to vector<8x128xf32>
    %24 = arith.addf %22, %23 : vector<8x128xf32>
    %cst_22 = arith.constant 0.000000e+00 : f32
    %25 = vector.broadcast %cst_22 : f32 to vector<8x128xf32>
    %26 = arith.maximumf %24, %25 : vector<8x128xf32>
    %c0_23 = arith.constant 0 : index
    %c0_24 = arith.constant 0 : index
    %27 = vector.load %arg10[%c0_23, %c0_24] : memref<128x128xf32, #tpu.memory_space<vmem>>, vector<128x128xf32>
    %c0_25 = arith.constant 0 : index
    %c0_26 = arith.constant 0 : index
    %28 = vector.load %arg11[%c0_25, %c0_26] : memref<1x128xf32, #tpu.memory_space<vmem>>, vector<1x128xf32>
    %cst_27 = arith.constant dense<0.000000e+00> : vector<8x128xf32>
    %29 = tpu.matmul %26, %27, %cst_27 {dimension_numbers = #tpu.dot_dimension_numbers<[1], [0], [0], [1], [0, 0, 1, 1], [], []>} : vector<8x128xf32>, vector<128x128xf32>, vector<8x128xf32> -> vector<8x128xf32>
    %30 = vector.broadcast %28 : vector<1x128xf32> to vector<8x128xf32>
    %31 = arith.addf %29, %30 : vector<8x128xf32>
    %cst_28 = arith.constant 0.000000e+00 : f32
    %32 = vector.broadcast %cst_28 : f32 to vector<8x128xf32>
    %33 = arith.maximumf %31, %32 : vector<8x128xf32>
    %c0_29 = arith.constant 0 : index
    %c0_30 = arith.constant 0 : index
    %34 = vector.load %arg12[%c0_29, %c0_30] : memref<128x128xf32, #tpu.memory_space<vmem>>, vector<128x128xf32>
    %c0_31 = arith.constant 0 : index
    %c0_32 = arith.constant 0 : index
    %35 = vector.load %arg13[%c0_31, %c0_32] : memref<1x128xf32, #tpu.memory_space<vmem>>, vector<1x128xf32>
    %cst_33 = arith.constant dense<0.000000e+00> : vector<8x128xf32>
    %36 = tpu.matmul %33, %34, %cst_33 {dimension_numbers = #tpu.dot_dimension_numbers<[1], [0], [0], [1], [0, 0, 1, 1], [], []>} : vector<8x128xf32>, vector<128x128xf32>, vector<8x128xf32> -> vector<8x128xf32>
    %37 = vector.broadcast %35 : vector<1x128xf32> to vector<8x128xf32>
    %38 = arith.addf %36, %37 : vector<8x128xf32>
    %cst_34 = arith.constant 0.000000e+00 : f32
    %39 = vector.broadcast %cst_34 : f32 to vector<8x128xf32>
    %40 = arith.maximumf %38, %39 : vector<8x128xf32>
    %c0_35 = arith.constant 0 : index
    %c0_36 = arith.constant 0 : index
    %41 = vector.load %arg14[%c0_35, %c0_36] : memref<8x128xf32, #tpu.memory_space<vmem>>, vector<8x128xf32>
    tpu.vector_store %arg14[%c0_35, %c0_36], %40 {strides = array<i32>} : memref<8x128xf32, #tpu.memory_space<vmem>>, vector<8x128xf32>,
    return
  }
  func.func @transform_0(%arg0: i32) -> (i32, i32) {
    %c0_i32 = arith.constant 0 : i32
    %c0_i32_0 = arith.constant 0 : i32
    return %arg0, %c0_i32 : i32, i32
  }
  func.func @transform_1(%arg0: i32) -> (i32, i32) {
    %c0_i32 = arith.constant 0 : i32
    %c0_i32_0 = arith.constant 0 : i32
    %c0_i32_1 = arith.constant 0 : i32
    return %c0_i32, %c0_i32_0 : i32, i32
  }
  func.func @transform_2(%arg0: i32) -> (i32, i32) {
    %c0_i32 = arith.constant 0 : i32
    %c0_i32_0 = arith.constant 0 : i32
    %c0_i32_1 = arith.constant 0 : i32
    return %c0_i32, %c0_i32_0 : i32, i32
  }
  func.func @transform_3(%arg0: i32) -> (i32, i32) {
    %c0_i32 = arith.constant 0 : i32
    %c0_i32_0 = arith.constant 0 : i32
    %c0_i32_1 = arith.constant 0 : i32
    return %c0_i32, %c0_i32_0 : i32, i32
  }
  func.func @transform_4(%arg0: i32) -> (i32, i32) {
    %c0_i32 = arith.constant 0 : i32
    %c0_i32_0 = arith.constant 0 : i32
    %c0_i32_1 = arith.constant 0 : i32
    return %c0_i32, %c0_i32_0 : i32, i32
  }
  func.func @transform_5(%arg0: i32) -> (i32, i32) {
    %c0_i32 = arith.constant 0 : i32
    %c0_i32_0 = arith.constant 0 : i32
    %c0_i32_1 = arith.constant 0 : i32
    return %c0_i32, %c0_i32_0 : i32, i32
  }
  func.func @transform_6(%arg0: i32) -> (i32, i32) {
    %c0_i32 = arith.constant 0 : i32
    %c0_i32_0 = arith.constant 0 : i32
    %c0_i32_1 = arith.constant 0 : i32
    return %c0_i32, %c0_i32_0 : i32, i32
  }
  func.func @transform_7(%arg0: i32) -> (i32, i32) {
    %c0_i32 = arith.constant 0 : i32
    %c0_i32_0 = arith.constant 0 : i32
    %c0_i32_1 = arith.constant 0 : i32
    return %c0_i32, %c0_i32_0 : i32, i32
  }
  func.func @transform_8(%arg0: i32) -> (i32, i32) {
    %c0_i32 = arith.constant 0 : i32
    %c0_i32_0 = arith.constant 0 : i32
    %c0_i32_1 = arith.constant 0 : i32
    return %c0_i32, %c0_i32_0 : i32, i32
  }
  func.func @transform_9(%arg0: i32) -> (i32, i32) {
    %c0_i32 = arith.constant 0 : i32
    %c0_i32_0 = arith.constant 0 : i32
    %c0_i32_1 = arith.constant 0 : i32
    return %c0_i32, %c0_i32_0 : i32, i32
  }
  func.func @transform_10(%arg0: i32) -> (i32, i32) {
    %c0_i32 = arith.constant 0 : i32
    %c0_i32_0 = arith.constant 0 : i32
    %c0_i32_1 = arith.constant 0 : i32
    return %c0_i32, %c0_i32_0 : i32, i32
  }
  func.func @transform_11(%arg0: i32) -> (i32, i32) {
    %c0_i32 = arith.constant 0 : i32
    %c0_i32_0 = arith.constant 0 : i32
    %c0_i32_1 = arith.constant 0 : i32
    return %c0_i32, %c0_i32_0 : i32, i32
  }
  func.func @transform_12(%arg0: i32) -> (i32, i32) {
    %c0_i32 = arith.constant 0 : i32
    %c0_i32_0 = arith.constant 0 : i32
    %c0_i32_1 = arith.constant 0 : i32
    return %c0_i32, %c0_i32_0 : i32, i32
  }
  func.func @transform_13(%arg0: i32) -> (i32, i32) {
    %c0_i32 = arith.constant 0 : i32
    %c0_i32_0 = arith.constant 0 : i32
    return %arg0, %c0_i32 : i32, i32
  }
}

</mosaic_0001>

<llo_original>
// kernel: sdae_forward.1
$region0: #{sdae_forward.1}
  #allocation0 [shape = 'u32[]', space=smem, size = 0x4, offset = 0x4, fixed_abs, tag = 'smem constant byte address 0x4 - core index']
  #allocation1 [shape = 'u32[144,128]{1,0:T(1,128)}', space=vmem, size = 0x12000, scoped, tag = 'internal scratch']
  %s0 = inlined_call_operand.hbm [shape: f32[8,32], index: 0, kind: input, shape index: {}]
  %s1 = inlined_call_operand.hbm [shape: f32[32,128], index: 1, kind: input, shape index: {}]
  %s2 = inlined_call_operand.vmem [shape: f32[1,128], index: 2, kind: input, shape index: {}]
  %s3 = inlined_call_operand.hbm [shape: f32[128,128], index: 3, kind: input, shape index: {}]
  %s4 = inlined_call_operand.vmem [shape: f32[1,128], index: 4, kind: input, shape index: {}]
  %s5 = inlined_call_operand.hbm [shape: f32[128,128], index: 5, kind: input, shape index: {}]
  %s6 = inlined_call_operand.vmem [shape: f32[1,128], index: 6, kind: input, shape index: {}]
  %s7 = inlined_call_operand.hbm [shape: f32[128,128], index: 7, kind: input, shape index: {}]
  %s8 = inlined_call_operand.vmem [shape: f32[1,128], index: 8, kind: input, shape index: {}]
  %s9 = inlined_call_operand.hbm [shape: f32[128,128], index: 9, kind: input, shape index: {}]
  %s10 = inlined_call_operand.vmem [shape: f32[1,128], index: 10, kind: input, shape index: {}]
  %s11 = inlined_call_operand.hbm [shape: f32[128,128], index: 11, kind: input, shape index: {}]
  %s12 = inlined_call_operand.vmem [shape: f32[1,128], index: 12, kind: input, shape index: {}]
  %s13 = inlined_call_operand.hbm [shape: f32[8,128], index: 13, kind: output, shape index: {}]
  %s14 = sld [smem:[#allocation0]]
  $region90: #{sdae_forward.1} parent=0
    _
  %s16 = ssub.s32 1, %s14
  %s17 = scalar_select 0, %s16, %s14
  $region1: #{sdae_forward.1} parent=0
    #allocation2 [shape = 'u8[4096]{0}', space=vmem, size = 0x1000, scoped, tag = 'input window, operand 0, single buffered']
    #allocation3 [shape = 's32[1]{0}', space=sflag, size = 0x4, scoped, tag = 'scoped memory for sdae_forward.1']
    #allocation4 [shape = 's32[1]{0}', space=sflag, size = 0x4, scoped, tag = 'scoped memory for sdae_forward.1']
    #allocation5 [shape = 'u8[16384]{0}', space=vmem, size = 0x4000, scoped, tag = 'input window, operand 1, single buffered']
    #allocation6 [shape = 's32[1]{0}', space=sflag, size = 0x4, scoped, tag = 'scoped memory for sdae_forward.1']
    #allocation7 [shape = 'u8[65536]{0}', space=vmem, size = 0x10000, scoped, tag = 'input window, operand 3, single buffered']
    #allocation8 [shape = 'u8[65536]{0}', space=vmem, size = 0x10000, scoped, tag = 'input window, operand 5, single buffered']
    #allocation9 [shape = 's32[1]{0}', space=sflag, size = 0x4, scoped, tag = 'scoped memory for sdae_forward.1']
    #allocation10 [shape = 'u8[65536]{0}', space=vmem, size = 0x10000, scoped, tag = 'input window, operand 7, single buffered']
    #allocation11 [shape = 'u8[65536]{0}', space=vmem, size = 0x10000, scoped, tag = 'input window, operand 9, single buffered']
    #allocation12 [shape = 's32[1]{0}', space=sflag, size = 0x4, scoped, tag = 'scoped memory for sdae_forward.1']
    #allocation13 [shape = 'u8[65536]{0}', space=vmem, size = 0x10000, scoped, tag = 'input window, operand 11, single buffered']
    #allocation14 [shape = 'u8[4096]{0}', space=vmem, size = 0x1000, scoped, tag = 'output window, operand 0, single buffered']
    %18 = vsyncpa [#allocation3], 0
    %19 = vsyncpa [#allocation6], 0
    %20 = vsyncpa [#allocation9], 0
    %21 = vsyncpa [#allocation12], 0
    %22 = vsyncpa [#allocation4], 0
    // Predicated region
    $region2: #{sdae_forward.1} parent=1 // pred_check
      _
    $region3: #{sdae_forward.1} parent=1 // pred_check_branch
      %24 = sbr.rel (0) target = $region5
    $region4: #{sdae_forward.1} parent=1 // pred_region
      %s26 = ssub.s32 128, 128
      %27 = vsyncadd [#allocation3], %s26
      %s29 = sshll.u32 [#allocation2], 4
      %s30 = int_to_ptr.vmem [resolvable:$true] %s29
      %32 = dma.hbm_to_vmem [thread:$0]  %s0, 128, %s30, [#allocation3]
    $region5: #{sdae_forward.1} parent=1 // pred_fallthru
      _
    // Predicated region
    $region6: #{sdae_forward.1} parent=1 // pred_check
      _
    $region7: #{sdae_forward.1} parent=1 // pred_check_branch
      %34 = sbr.rel (0) target = $region9
    $region8: #{sdae_forward.1} parent=1 // pred_region
      %s36 = ssub.s32 512, 512
      %37 = vsyncadd [#allocation6], %s36
      %s38 = sshll.u32 [#allocation5], 4
      %s39 = int_to_ptr.vmem [resolvable:$true] %s38
      %44 = dma.hbm_to_vmem [thread:$0]  %s1, 512, %s39, [#allocation6], 128, 128, 8
    $region9: #{sdae_forward.1} parent=1 // pred_fallthru
      _
    // Predicated region
    $region10: #{sdae_forward.1} parent=1 // pred_check
      _
    $region11: #{sdae_forward.1} parent=1 // pred_check_branch
      %46 = sbr.rel (0) target = $region13
    $region12: #{sdae_forward.1} parent=1 // pred_region
      _
    $region13: #{sdae_forward.1} parent=1 // pred_fallthru
      _
    // Predicated region
    $region14: #{sdae_forward.1} parent=1 // pred_check
      _
    $region15: #{sdae_forward.1} parent=1 // pred_check_branch
      %48 = sbr.rel (0) target = $region17
    $region16: #{sdae_forward.1} parent=1 // pred_region
      %s50 = ssub.s32 2048, 2048
      %51 = vsyncadd [#allocation6], %s50
      %s52 = sshll.u32 [#allocation7], 4
      %s53 = int_to_ptr.vmem [resolvable:$true] %s52
      %58 = dma.hbm_to_vmem [thread:$0]  %s3, 2048, %s53, [#allocation6], 128, 128, 8
    $region17: #{sdae_forward.1} parent=1 // pred_fallthru
      _
    // Predicated region
    $region18: #{sdae_forward.1} parent=1 // pred_check
      _
    $region19: #{sdae_forward.1} parent=1 // pred_check_branch
      %60 = sbr.rel (0) target = $region21
    $region20: #{sdae_forward.1} parent=1 // pred_region
      _
    $region21: #{sdae_forward.1} parent=1 // pred_fallthru
      _
    // Predicated region
    $region22: #{sdae_forward.1} parent=1 // pred_check
      _
    $region23: #{sdae_forward.1} parent=1 // pred_check_branch
      %62 = sbr.rel (0) target = $region25
    $region24: #{sdae_forward.1} parent=1 // pred_region
      %s64 = ssub.s32 2048, 2048
      %65 = vsyncadd [#allocation9], %s64
      %s66 = sshll.u32 [#allocation8], 4
      %s67 = int_to_ptr.vmem [resolvable:$true] %s66
      %72 = dma.hbm_to_vmem [thread:$0]  %s5, 2048, %s67, [#allocation9], 128, 128, 8
    $region25: #{sdae_forward.1} parent=1 // pred_fallthru
      _
    // Predicated region
    $region26: #{sdae_forward.1} parent=1 // pred_check
      _
    $region27: #{sdae_forward.1} parent=1 // pred_check_branch
      %74 = sbr.rel (0) target = $region29
    $region28: #{sdae_forward.1} parent=1 // pred_region
      _
    $region29: #{sdae_forward.1} parent=1 // pred_fallthru
      _
    // Predicated region
    $region30: #{sdae_forward.1} parent=1 // pred_check
      _
    $region31: #{sdae_forward.1} parent=1 // pred_check_branch
      %76 = sbr.rel (0) target = $region33
    $region32: #{sdae_forward.1} parent=1 // pred_region
      %s78 = ssub.s32 2048, 2048
      %79 = vsyncadd [#allocation9], %s78
      %s80 = sshll.u32 [#allocation10], 4
      %s81 = int_to_ptr.vmem [resolvable:$true] %s80
      %86 = dma.hbm_to_vmem [thread:$0]  %s7, 2048, %s81, [#allocation9], 128, 128, 8
    $region33: #{sdae_forward.1} parent=1 // pred_fallthru
      _
    // Predicated region
    $region34: #{sdae_forward.1} parent=1 // pred_check
      _
    $region35: #{sdae_forward.1} parent=1 // pred_check_branch
      %88 = sbr.rel (0) target = $region37
    $region36: #{sdae_forward.1} parent=1 // pred_region
      _
    $region37: #{sdae_forward.1} parent=1 // pred_fallthru
      _
    // Predicated region
    $region38: #{sdae_forward.1} parent=1 // pred_check
      _
    $region39: #{sdae_forward.1} parent=1 // pred_check_branch
      %90 = sbr.rel (0) target = $region41
    $region40: #{sdae_forward.1} parent=1 // pred_region
      %s92 = ssub.s32 2048, 2048
      %93 = vsyncadd [#allocation12], %s92
      %s94 = sshll.u32 [#allocation11], 4
      %s95 = int_to_ptr.vmem [resolvable:$true] %s94
      %100 = dma.hbm_to_vmem [thread:$0]  %s9, 2048, %s95, [#allocation12], 128, 128, 8
    $region41: #{sdae_forward.1} parent=1 // pred_fallthru
      _
    // Predicated region
    $region42: #{sdae_forward.1} parent=1 // pred_check
      _
    $region43: #{sdae_forward.1} parent=1 // pred_check_branch
      %102 = sbr.rel (0) target = $region45
    $region44: #{sdae_forward.1} parent=1 // pred_region
      _
    $region45: #{sdae_forward.1} parent=1 // pred_fallthru
      _
    // Predicated region
    $region46: #{sdae_forward.1} parent=1 // pred_check
      _
    $region47: #{sdae_forward.1} parent=1 // pred_check_branch
      %104 = sbr.rel (0) target = $region49
    $region48: #{sdae_forward.1} parent=1 // pred_region
      %s106 = ssub.s32 2048, 2048
      %107 = vsyncadd [#allocation12], %s106
      %s108 = sshll.u32 [#allocation13], 4
      %s109 = int_to_ptr.vmem [resolvable:$true] %s108
      %114 = dma.hbm_to_vmem [thread:$0]  %s11, 2048, %s109, [#allocation12], 128, 128, 8
    $region49: #{sdae_forward.1} parent=1 // pred_fallthru
      _
    // Predicated region
    $region50: #{sdae_forward.1} parent=1 // pred_check
      _
    $region51: #{sdae_forward.1} parent=1 // pred_check_branch
      %116 = sbr.rel (0) target = $region53
    $region52: #{sdae_forward.1} parent=1 // pred_region
      _
    $region53: #{sdae_forward.1} parent=1 // pred_fallthru
      _
    // Predicated region
    $region54: #{sdae_forward.1} parent=1 // pred_check
      _
    $region55: #{sdae_forward.1} parent=1 // pred_check_branch
      %118 = sbr.rel (0) target = $region57
    $region56: #{sdae_forward.1} parent=1 // pred_region
      %119 = dma.done [#allocation3], 128
    $region57: #{sdae_forward.1} parent=1 // pred_fallthru
      _
    // Predicated region
    $region58: #{sdae_forward.1} parent=1 // pred_check
      _
    $region59: #{sdae_forward.1} parent=1 // pred_check_branch
      %121 = sbr.rel (0) target = $region61
    $region60: #{sdae_forward.1} parent=1 // pred_region
      %122 = dma.done [#allocation6], 512
    $region61: #{sdae_forward.1} parent=1 // pred_fallthru
      _
    // Predicated region
    $region62: #{sdae_forward.1} parent=1 // pred_check
      _
    $region63: #{sdae_forward.1} parent=1 // pred_check_branch
      %124 = sbr.rel (0) target = $region65
    $region64: #{sdae_forward.1} parent=1 // pred_region
      %125 = dma.done [#allocation6], 2048
    $region65: #{sdae_forward.1} parent=1 // pred_fallthru
      _
    // Predicated region
    $region66: #{sdae_forward.1} parent=1 // pred_check
      _
    $region67: #{sdae_forward.1} parent=1 // pred_check_branch
      %127 = sbr.rel (0) target = $region69
    $region68: #{sdae_forward.1} parent=1 // pred_region
      %128 = dma.done [#allocation9], 2048
    $region69: #{sdae_forward.1} parent=1 // pred_fallthru
      _
    // Predicated region
    $region70: #{sdae_forward.1} parent=1 // pred_check
      _
    $region71: #{sdae_forward.1} parent=1 // pred_check_branch
      %130 = sbr.rel (0) target = $region73
    $region72: #{sdae_forward.1} parent=1 // pred_region
      %131 = dma.done [#allocation9], 2048
    $region73: #{sdae_forward.1} parent=1 // pred_fallthru
      _
    // Predicated region
    $region74: #{sdae_forward.1} parent=1 // pred_check
      _
    $region75: #{sdae_forward.1} parent=1 // pred_check_branch
      %133 = sbr.rel (0) target = $region77
    $region76: #{sdae_forward.1} parent=1 // pred_region
      %134 = dma.done [#allocation12], 2048
    $region77: #{sdae_forward.1} parent=1 // pred_fallthru
      _
    // Predicated region
    $region78: #{sdae_forward.1} parent=1 // pred_check
      _
    $region79: #{sdae_forward.1} parent=1 // pred_check_branch
      %136 = sbr.rel (0) target = $region81
    $region80: #{sdae_forward.1} parent=1 // pred_region
      %137 = dma.done [#allocation12], 2048
    $region81: #{sdae_forward.1} parent=1 // pred_fallthru
      _
    %v138 = vld [vmem:[#allocation2] sm:$0xff]
    %v139 = vld [vmem:[#allocation5] sm:$0xff]
    %v140 = vld [vmem:[#allocation5 + $0x8] sm:$0xff]
    %v141 = vld [vmem:[#allocation5 + $0x10] sm:$0xff]
    %v142 = vld [vmem:[#allocation5 + $0x18] sm:$0xff]
    %v143 = vld [vmem:[%s2] sm:$0x1]
    %v145 = vlaneseq
    %v146 = vshrl.u32 %v145, 7
    %v147 = vsub.s32 0, %v146
    %v148 = vrot.slane %v143, %v147
    %vm150 = vcmask 261120
    %v152 = vsel %vm150, %v138, 0
    %154 = vmatprep.subr.mxu0 0.0
    %155 = vmatpush1.msra.mxu0 %v139
    %156 = vmatprep.subr.mxu0 0.0
    %157 = vmatpush1.msra.mxu0 %v140
    %158 = vmatprep.subr.mxu0 0.0
    %159 = vmatpush1.msra.mxu0 %v141
    %160 = vmatprep.subr.mxu0 0.0
    %161 = vmatpush1.msra.mxu0 %v142
    %162 = vmatprep.subr.mxu0 0.0
    %163 = vmatpush1.msra.mxu0 0.0
    %164 = vmatprep.subr.mxu0 0.0
    %165 = vmatpush1.msra.mxu0 0.0
    %166 = vmatprep.subr.mxu0 0.0
    %167 = vmatpush1.msra.mxu0 0.0
    %168 = vmatprep.subr.mxu0 0.0
    %169 = vmatpush1.msra.mxu0 0.0
    %170 = vmatprep.subr.mxu0 0.0
    %171 = vmatpush1.msra.mxu0 0.0
    %172 = vmatprep.subr.mxu0 0.0
    %173 = vmatpush1.msra.mxu0 0.0
    %174 = vmatprep.subr.mxu0 0.0
    %175 = vmatpush1.msra.mxu0 0.0
    %176 = vmatprep.subr.mxu0 0.0
    %177 = vmatpush1.msra.mxu0 0.0
    %178 = vmatprep.subr.mxu0 0.0
    %179 = vmatpush1.msra.mxu0 0.0
    %180 = vmatprep.subr.mxu0 0.0
    %181 = vmatpush1.msra.mxu0 0.0
    %182 = vmatprep.subr.mxu0 0.0
    %183 = vmatpush1.msra.mxu0 0.0
    %184 = vmatprep.subr.mxu0 0.0
    %185 = vmatpush1.msra.mxu0 0.0
    %186 = vmatprep.subr.mxu0 0.0
    %187 = vmatpush1.msra.mxu0 0.0
    %188 = vmatprep.subr.mxu0 0.0
    %189 = vmatpush1.msra.mxu0 0.0
    %190 = vmatprep.subr.mxu0 0.0
    %191 = vmatpush1.msra.mxu0 0.0
    %192 = vmatprep.subr.mxu0 0.0
    %193 = vmatpush1.msra.mxu0 0.0
    %194 = vmatprep.subr.mxu0 0.0
    %195 = vmatpush1.msra.mxu0 0.0
    %196 = vmatprep.subr.mxu0 0.0
    %197 = vmatpush1.msra.mxu0 0.0
    %198 = vmatprep.subr.mxu0 0.0
    %199 = vmatpush1.msra.mxu0 0.0
    %200 = vmatprep.subr.mxu0 0.0
    %201 = vmatpush1.msra.mxu0 0.0
    %202 = vmatprep.subr.mxu0 0.0
    %203 = vmatpush1.msra.mxu0 0.0
    %204 = vmatprep.subr.mxu0 0.0
    %205 = vmatpush1.msra.mxu0 0.0
    %206 = vmatprep.subr.mxu0 0.0
    %207 = vmatpush1.msra.mxu0 0.0
    %208 = vmatprep.subr.mxu0 0.0
    %209 = vmatpush1.msra.mxu0 0.0
    %210 = vmatprep.subr.mxu0 0.0
    %211 = vmatpush1.msra.mxu0 0.0
    %212 = vmatprep.subr.mxu0 0.0
    %213 = vmatpush1.msra.mxu0 0.0
    %214 = vmatprep.subr.mxu0 0.0
    %215 = vmatpush1.msra.mxu0 0.0
    %216 = vmatprep.subr.mxu0 0.0
    %217 = vmatpush1.msra.mxu0 0.0
    %218 = vmatprep.mubr.f32.mxu0 0.0
    %219 = vmatmul.mubr.f32.gmra.mrb[0].mxu0 %v152
    %v220 = vpop.f32.mrb[0].mxu0
    %v221 = vadd.f32 %v148, %v220
    %v222 = vpop.f32.mrb[0].mxu0
    %223 = vdwg.mxu0
    %v224 = vmax.f32 %v221, 0.0
    %v225 = vld [vmem:[#allocation7] sm:$0xff]
    %v226 = vld [vmem:[#allocation7 + $0x8] sm:$0xff]
    %v227 = vld [vmem:[#allocation7 + $0x10] sm:$0xff]
    %v228 = vld [vmem:[#allocation7 + $0x18] sm:$0xff]
    %v229 = vld [vmem:[#allocation7 + $0x20] sm:$0xff]
    %v230 = vld [vmem:[#allocation7 + $0x28] sm:$0xff]
    %v231 = vld [vmem:[#allocation7 + $0x30] sm:$0xff]
    %v232 = vld [vmem:[#allocation7 + $0x38] sm:$0xff]
    %v233 = vld [vmem:[#allocation7 + $0x40] sm:$0xff]
    %v234 = vld [vmem:[#allocation7 + $0x48] sm:$0xff]
    %v235 = vld [vmem:[#allocation7 + $0x50] sm:$0xff]
    %v236 = vld [vmem:[#allocation7 + $0x58] sm:$0xff]
    %v237 = vld [vmem:[#allocation7 + $0x60] sm:$0xff]
    %v238 = vld [vmem:[#allocation7 + $0x68] sm:$0xff]
    %v239 = vld [vmem:[#allocation7 + $0x70] sm:$0xff]
    %v240 = vld [vmem:[#allocation7 + $0x78] sm:$0xff]
    %v241 = vld [vmem:[%s4] sm:$0x1]
    %v243 = vlaneseq
    %v244 = vshrl.u32 %v243, 7
    %v245 = vsub.s32 0, %v244
    %v246 = vrot.slane %v241, %v245
    %248 = vmatprep.subr.mxu0 0.0
    %249 = vmatpush1.msra.mxu0 %v225
    %250 = vmatprep.subr.mxu0 0.0
    %251 = vmatpush1.msra.mxu0 %v226
    %252 = vmatprep.subr.mxu0 0.0
    %253 = vmatpush1.msra.mxu0 %v227
    %254 = vmatprep.subr.mxu0 0.0
    %255 = vmatpush1.msra.mxu0 %v228
    %256 = vmatprep.subr.mxu0 0.0
    %257 = vmatpush1.msra.mxu0 %v229
    %258 = vmatprep.subr.mxu0 0.0
    %259 = vmatpush1.msra.mxu0 %v230
    %260 = vmatprep.subr.mxu0 0.0
    %261 = vmatpush1.msra.mxu0 %v231
    %262 = vmatprep.subr.mxu0 0.0
    %263 = vmatpush1.msra.mxu0 %v232
    %264 = vmatprep.subr.mxu0 0.0
    %265 = vmatpush1.msra.mxu0 %v233
    %266 = vmatprep.subr.mxu0 0.0
    %267 = vmatpush1.msra.mxu0 %v234
    %268 = vmatprep.subr.mxu0 0.0
    %269 = vmatpush1.msra.mxu0 %v235
    %270 = vmatprep.subr.mxu0 0.0
    %271 = vmatpush1.msra.mxu0 %v236
    %272 = vmatprep.subr.mxu0 0.0
    %273 = vmatpush1.msra.mxu0 %v237
    %274 = vmatprep.subr.mxu0 0.0
    %275 = vmatpush1.msra.mxu0 %v238
    %276 = vmatprep.subr.mxu0 0.0
    %277 = vmatpush1.msra.mxu0 %v239
    %278 = vmatprep.subr.mxu0 0.0
    %279 = vmatpush1.msra.mxu0 %v240
    %280 = vmatprep.subr.mxu0 0.0
    %281 = vmatpush1.msra.mxu0 0.0
    %282 = vmatprep.subr.mxu0 0.0
    %283 = vmatpush1.msra.mxu0 0.0
    %284 = vmatprep.subr.mxu0 0.0
    %285 = vmatpush1.msra.mxu0 0.0
    %286 = vmatprep.subr.mxu0 0.0
    %287 = vmatpush1.msra.mxu0 0.0
    %288 = vmatprep.subr.mxu0 0.0
    %289 = vmatpush1.msra.mxu0 0.0
    %290 = vmatprep.subr.mxu0 0.0
    %291 = vmatpush1.msra.mxu0 0.0
    %292 = vmatprep.subr.mxu0 0.0
    %293 = vmatpush1.msra.mxu0 0.0
    %294 = vmatprep.subr.mxu0 0.0
    %295 = vmatpush1.msra.mxu0 0.0
    %296 = vmatprep.subr.mxu0 0.0
    %297 = vmatpush1.msra.mxu0 0.0
    %298 = vmatprep.subr.mxu0 0.0
    %299 = vmatpush1.msra.mxu0 0.0
    %300 = vmatprep.subr.mxu0 0.0
    %301 = vmatpush1.msra.mxu0 0.0
    %302 = vmatprep.subr.mxu0 0.0
    %303 = vmatpush1.msra.mxu0 0.0
    %304 = vmatprep.subr.mxu0 0.0
    %305 = vmatpush1.msra.mxu0 0.0
    %306 = vmatprep.subr.mxu0 0.0
    %307 = vmatpush1.msra.mxu0 0.0
    %308 = vmatprep.subr.mxu0 0.0
    %309 = vmatpush1.msra.mxu0 0.0
    %310 = vmatprep.subr.mxu0 0.0
    %311 = vmatpush1.msra.mxu0 0.0
    %312 = vmatprep.mubr.f32.mxu0 0.0
    %313 = vmatmul.mubr.f32.gmra.mrb[0].mxu0 %v224
    %v314 = vpop.f32.mrb[0].mxu0
    %v315 = vadd.f32 %v246, %v314
    %v316 = vpop.f32.mrb[0].mxu0
    %317 = vdwg.mxu0
    %v318 = vmax.f32 %v315, 0.0
    %v319 = vld [vmem:[#allocation8] sm:$0xff]
    %v320 = vld [vmem:[#allocation8 + $0x8] sm:$0xff]
    %v321 = vld [vmem:[#allocation8 + $0x10] sm:$0xff]
    %v322 = vld [vmem:[#allocation8 + $0x18] sm:$0xff]
    %v323 = vld [vmem:[#allocation8 + $0x20] sm:$0xff]
    %v324 = vld [vmem:[#allocation8 + $0x28] sm:$0xff]
    %v325 = vld [vmem:[#allocation8 + $0x30] sm:$0xff]
    %v326 = vld [vmem:[#allocation8 + $0x38] sm:$0xff]
    %v327 = vld [vmem:[#allocation8 + $0x40] sm:$0xff]
    %v328 = vld [vmem:[#allocation8 + $0x48] sm:$0xff]
    %v329 = vld [vmem:[#allocation8 + $0x50] sm:$0xff]
    %v330 = vld [vmem:[#allocation8 + $0x58] sm:$0xff]
    %v331 = vld [vmem:[#allocation8 + $0x60] sm:$0xff]
    %v332 = vld [vmem:[#allocation8 + $0x68] sm:$0xff]
    %v333 = vld [vmem:[#allocation8 + $0x70] sm:$0xff]
    %v334 = vld [vmem:[#allocation8 + $0x78] sm:$0xff]
    %v335 = vld [vmem:[%s6] sm:$0x1]
    %v337 = vlaneseq
    %v338 = vshrl.u32 %v337, 7
    %v339 = vsub.s32 0, %v338
    %v340 = vrot.slane %v335, %v339
    %342 = vmatprep.subr.mxu0 0.0
    %343 = vmatpush1.msra.mxu0 %v319
    %344 = vmatprep.subr.mxu0 0.0
    %345 = vmatpush1.msra.mxu0 %v320
    %346 = vmatprep.subr.mxu0 0.0
    %347 = vmatpush1.msra.mxu0 %v321
    %348 = vmatprep.subr.mxu0 0.0
    %349 = vmatpush1.msra.mxu0 %v322
    %350 = vmatprep.subr.mxu0 0.0
    %351 = vmatpush1.msra.mxu0 %v323
    %352 = vmatprep.subr.mxu0 0.0
    %353 = vmatpush1.msra.mxu0 %v324
    %354 = vmatprep.subr.mxu0 0.0
    %355 = vmatpush1.msra.mxu0 %v325
    %356 = vmatprep.subr.mxu0 0.0
    %357 = vmatpush1.msra.mxu0 %v326
    %358 = vmatprep.subr.mxu0 0.0
    %359 = vmatpush1.msra.mxu0 %v327
    %360 = vmatprep.subr.mxu0 0.0
    %361 = vmatpush1.msra.mxu0 %v328
    %362 = vmatprep.subr.mxu0 0.0
    %363 = vmatpush1.msra.mxu0 %v329
    %364 = vmatprep.subr.mxu0 0.0
    %365 = vmatpush1.msra.mxu0 %v330
    %366 = vmatprep.subr.mxu0 0.0
    %367 = vmatpush1.msra.mxu0 %v331
    %368 = vmatprep.subr.mxu0 0.0
    %369 = vmatpush1.msra.mxu0 %v332
    %370 = vmatprep.subr.mxu0 0.0
    %371 = vmatpush1.msra.mxu0 %v333
    %372 = vmatprep.subr.mxu0 0.0
    %373 = vmatpush1.msra.mxu0 %v334
    %374 = vmatprep.subr.mxu0 0.0
    %375 = vmatpush1.msra.mxu0 0.0
    %376 = vmatprep.subr.mxu0 0.0
    %377 = vmatpush1.msra.mxu0 0.0
    %378 = vmatprep.subr.mxu0 0.0
    %379 = vmatpush1.msra.mxu0 0.0
    %380 = vmatprep.subr.mxu0 0.0
    %381 = vmatpush1.msra.mxu0 0.0
    %382 = vmatprep.subr.mxu0 0.0
    %383 = vmatpush1.msra.mxu0 0.0
    %384 = vmatprep.subr.mxu0 0.0
    %385 = vmatpush1.msra.mxu0 0.0
    %386 = vmatprep.subr.mxu0 0.0
    %387 = vmatpush1.msra.mxu0 0.0
    %388 = vmatprep.subr.mxu0 0.0
    %389 = vmatpush1.msra.mxu0 0.0
    %390 = vmatprep.subr.mxu0 0.0
    %391 = vmatpush1.msra.mxu0 0.0
    %392 = vmatprep.subr.mxu0 0.0
    %393 = vmatpush1.msra.mxu0 0.0
    %394 = vmatprep.subr.mxu0 0.0
    %395 = vmatpush1.msra.mxu0 0.0
    %396 = vmatprep.subr.mxu0 0.0
    %397 = vmatpush1.msra.mxu0 0.0
    %398 = vmatprep.subr.mxu0 0.0
    %399 = vmatpush1.msra.mxu0 0.0
    %400 = vmatprep.subr.mxu0 0.0
    %401 = vmatpush1.msra.mxu0 0.0
    %402 = vmatprep.subr.mxu0 0.0
    %403 = vmatpush1.msra.mxu0 0.0
    %404 = vmatprep.subr.mxu0 0.0
    %405 = vmatpush1.msra.mxu0 0.0
    %406 = vmatprep.mubr.f32.mxu0 0.0
    %407 = vmatmul.mubr.f32.gmra.mrb[0].mxu0 %v318
    %v408 = vpop.f32.mrb[0].mxu0
    %v409 = vadd.f32 %v340, %v408
    %v410 = vpop.f32.mrb[0].mxu0
    %411 = vdwg.mxu0
    %v412 = vld [vmem:[#allocation10] sm:$0xff]
    %v413 = vld [vmem:[#allocation10 + $0x8] sm:$0xff]
    %v414 = vld [vmem:[#allocation10 + $0x10] sm:$0xff]
    %v415 = vld [vmem:[#allocation10 + $0x18] sm:$0xff]
    %v416 = vld [vmem:[#allocation10 + $0x20] sm:$0xff]
    %v417 = vld [vmem:[#allocation10 + $0x28] sm:$0xff]
    %v418 = vld [vmem:[#allocation10 + $0x30] sm:$0xff]
    %v419 = vld [vmem:[#allocation10 + $0x38] sm:$0xff]
    %v420 = vld [vmem:[#allocation10 + $0x40] sm:$0xff]
    %v421 = vld [vmem:[#allocation10 + $0x48] sm:$0xff]
    %v422 = vld [vmem:[#allocation10 + $0x50] sm:$0xff]
    %v423 = vld [vmem:[#allocation10 + $0x58] sm:$0xff]
    %v424 = vld [vmem:[#allocation10 + $0x60] sm:$0xff]
    %v425 = vld [vmem:[#allocation10 + $0x68] sm:$0xff]
    %v426 = vld [vmem:[#allocation10 + $0x70] sm:$0xff]
    %v427 = vld [vmem:[#allocation10 + $0x78] sm:$0xff]
    %v428 = vld [vmem:[%s8] sm:$0x1]
    %v430 = vlaneseq
    %v431 = vshrl.u32 %v430, 7
    %v432 = vsub.s32 0, %v431
    %v433 = vrot.slane %v428, %v432
    %435 = vmatprep.subr.mxu0 0.0
    %436 = vmatpush1.msra.mxu0 %v412
    %437 = vmatprep.subr.mxu0 0.0
    %438 = vmatpush1.msra.mxu0 %v413
    %439 = vmatprep.subr.mxu0 0.0
    %440 = vmatpush1.msra.mxu0 %v414
    %441 = vmatprep.subr.mxu0 0.0
    %442 = vmatpush1.msra.mxu0 %v415
    %443 = vmatprep.subr.mxu0 0.0
    %444 = vmatpush1.msra.mxu0 %v416
    %445 = vmatprep.subr.mxu0 0.0
    %446 = vmatpush1.msra.mxu0 %v417
    %447 = vmatprep.subr.mxu0 0.0
    %448 = vmatpush1.msra.mxu0 %v418
    %449 = vmatprep.subr.mxu0 0.0
    %450 = vmatpush1.msra.mxu0 %v419
    %451 = vmatprep.subr.mxu0 0.0
    %452 = vmatpush1.msra.mxu0 %v420
    %453 = vmatprep.subr.mxu0 0.0
    %454 = vmatpush1.msra.mxu0 %v421
    %455 = vmatprep.subr.mxu0 0.0
    %456 = vmatpush1.msra.mxu0 %v422
    %457 = vmatprep.subr.mxu0 0.0
    %458 = vmatpush1.msra.mxu0 %v423
    %459 = vmatprep.subr.mxu0 0.0
    %460 = vmatpush1.msra.mxu0 %v424
    %461 = vmatprep.subr.mxu0 0.0
    %462 = vmatpush1.msra.mxu0 %v425
    %463 = vmatprep.subr.mxu0 0.0
    %464 = vmatpush1.msra.mxu0 %v426
    %465 = vmatprep.subr.mxu0 0.0
    %466 = vmatpush1.msra.mxu0 %v427
    %467 = vmatprep.subr.mxu0 0.0
    %468 = vmatpush1.msra.mxu0 0.0
    %469 = vmatprep.subr.mxu0 0.0
    %470 = vmatpush1.msra.mxu0 0.0
    %471 = vmatprep.subr.mxu0 0.0
    %472 = vmatpush1.msra.mxu0 0.0
    %473 = vmatprep.subr.mxu0 0.0
    %474 = vmatpush1.msra.mxu0 0.0
    %475 = vmatprep.subr.mxu0 0.0
    %476 = vmatpush1.msra.mxu0 0.0
    %477 = vmatprep.subr.mxu0 0.0
    %478 = vmatpush1.msra.mxu0 0.0
    %479 = vmatprep.subr.mxu0 0.0
    %480 = vmatpush1.msra.mxu0 0.0
    %481 = vmatprep.subr.mxu0 0.0
    %482 = vmatpush1.msra.mxu0 0.0
    %483 = vmatprep.subr.mxu0 0.0
    %484 = vmatpush1.msra.mxu0 0.0
    %485 = vmatprep.subr.mxu0 0.0
    %486 = vmatpush1.msra.mxu0 0.0
    %487 = vmatprep.subr.mxu0 0.0
    %488 = vmatpush1.msra.mxu0 0.0
    %489 = vmatprep.subr.mxu0 0.0
    %490 = vmatpush1.msra.mxu0 0.0
    %491 = vmatprep.subr.mxu0 0.0
    %492 = vmatpush1.msra.mxu0 0.0
    %493 = vmatprep.subr.mxu0 0.0
    %494 = vmatpush1.msra.mxu0 0.0
    %495 = vmatprep.subr.mxu0 0.0
    %496 = vmatpush1.msra.mxu0 0.0
    %497 = vmatprep.subr.mxu0 0.0
    %498 = vmatpush1.msra.mxu0 0.0
    %499 = vmatprep.mubr.f32.mxu0 0.0
    %500 = vmatmul.mubr.f32.gmra.mrb[0].mxu0 %v409
    %v501 = vpop.f32.mrb[0].mxu0
    %v502 = vadd.f32 %v433, %v501
    %v503 = vpop.f32.mrb[0].mxu0
    %504 = vdwg.mxu0
    %v505 = vmax.f32 %v502, 0.0
    %v506 = vld [vmem:[#allocation11] sm:$0xff]
    %v507 = vld [vmem:[#allocation11 + $0x8] sm:$0xff]
    %v508 = vld [vmem:[#allocation11 + $0x10] sm:$0xff]
    %v509 = vld [vmem:[#allocation11 + $0x18] sm:$0xff]
    %v510 = vld [vmem:[#allocation11 + $0x20] sm:$0xff]
    %v511 = vld [vmem:[#allocation11 + $0x28] sm:$0xff]
    %v512 = vld [vmem:[#allocation11 + $0x30] sm:$0xff]
    %v513 = vld [vmem:[#allocation11 + $0x38] sm:$0xff]
    %v514 = vld [vmem:[#allocation11 + $0x40] sm:$0xff]
    %v515 = vld [vmem:[#allocation11 + $0x48] sm:$0xff]
    %v516 = vld [vmem:[#allocation11 + $0x50] sm:$0xff]
    %v517 = vld [vmem:[#allocation11 + $0x58] sm:$0xff]
    %v518 = vld [vmem:[#allocation11 + $0x60] sm:$0xff]
    %v519 = vld [vmem:[#allocation11 + $0x68] sm:$0xff]
    %v520 = vld [vmem:[#allocation11 + $0x70] sm:$0xff]
    %v521 = vld [vmem:[#allocation11 + $0x78] sm:$0xff]
    %v522 = vld [vmem:[%s10] sm:$0x1]
    %v524 = vlaneseq
    %v525 = vshrl.u32 %v524, 7
    %v526 = vsub.s32 0, %v525
    %v527 = vrot.slane %v522, %v526
    %529 = vmatprep.subr.mxu0 0.0
    %530 = vmatpush1.msra.mxu0 %v506
    %531 = vmatprep.subr.mxu0 0.0
    %532 = vmatpush1.msra.mxu0 %v507
    %533 = vmatprep.subr.mxu0 0.0
    %534 = vmatpush1.msra.mxu0 %v508
    %535 = vmatprep.subr.mxu0 0.0
    %536 = vmatpush1.msra.mxu0 %v509
    %537 = vmatprep.subr.mxu0 0.0
    %538 = vmatpush1.msra.mxu0 %v510
    %539 = vmatprep.subr.mxu0 0.0
    %540 = vmatpush1.msra.mxu0 %v511
    %541 = vmatprep.subr.mxu0 0.0
    %542 = vmatpush1.msra.mxu0 %v512
    %543 = vmatprep.subr.mxu0 0.0
    %544 = vmatpush1.msra.mxu0 %v513
    %545 = vmatprep.subr.mxu0 0.0
    %546 = vmatpush1.msra.mxu0 %v514
    %547 = vmatprep.subr.mxu0 0.0
    %548 = vmatpush1.msra.mxu0 %v515
    %549 = vmatprep.subr.mxu0 0.0
    %550 = vmatpush1.msra.mxu0 %v516
    %551 = vmatprep.subr.mxu0 0.0
    %552 = vmatpush1.msra.mxu0 %v517
    %553 = vmatprep.subr.mxu0 0.0
    %554 = vmatpush1.msra.mxu0 %v518
    %555 = vmatprep.subr.mxu0 0.0
    %556 = vmatpush1.msra.mxu0 %v519
    %557 = vmatprep.subr.mxu0 0.0
    %558 = vmatpush1.msra.mxu0 %v520
    %559 = vmatprep.subr.mxu0 0.0
    %560 = vmatpush1.msra.mxu0 %v521
    %561 = vmatprep.subr.mxu0 0.0
    %562 = vmatpush1.msra.mxu0 0.0
    %563 = vmatprep.subr.mxu0 0.0
    %564 = vmatpush1.msra.mxu0 0.0
    %565 = vmatprep.subr.mxu0 0.0
    %566 = vmatpush1.msra.mxu0 0.0
    %567 = vmatprep.subr.mxu0 0.0
    %568 = vmatpush1.msra.mxu0 0.0
    %569 = vmatprep.subr.mxu0 0.0
    %570 = vmatpush1.msra.mxu0 0.0
    %571 = vmatprep.subr.mxu0 0.0
    %572 = vmatpush1.msra.mxu0 0.0
    %573 = vmatprep.subr.mxu0 0.0
    %574 = vmatpush1.msra.mxu0 0.0
    %575 = vmatprep.subr.mxu0 0.0
    %576 = vmatpush1.msra.mxu0 0.0
    %577 = vmatprep.subr.mxu0 0.0
    %578 = vmatpush1.msra.mxu0 0.0
    %579 = vmatprep.subr.mxu0 0.0
    %580 = vmatpush1.msra.mxu0 0.0
    %581 = vmatprep.subr.mxu0 0.0
    %582 = vmatpush1.msra.mxu0 0.0
    %583 = vmatprep.subr.mxu0 0.0
    %584 = vmatpush1.msra.mxu0 0.0
    %585 = vmatprep.subr.mxu0 0.0
    %586 = vmatpush1.msra.mxu0 0.0
    %587 = vmatprep.subr.mxu0 0.0
    %588 = vmatpush1.msra.mxu0 0.0
    %589 = vmatprep.subr.mxu0 0.0
    %590 = vmatpush1.msra.mxu0 0.0
    %591 = vmatprep.subr.mxu0 0.0
    %592 = vmatpush1.msra.mxu0 0.0
    %593 = vmatprep.mubr.f32.mxu0 0.0
    %594 = vmatmul.mubr.f32.gmra.mrb[0].mxu0 %v505
    %v595 = vpop.f32.mrb[0].mxu0
    %v596 = vadd.f32 %v527, %v595
    %v597 = vpop.f32.mrb[0].mxu0
    %598 = vdwg.mxu0
    %v599 = vmax.f32 %v596, 0.0
    %v600 = vld [vmem:[#allocation13] sm:$0xff]
    %v601 = vld [vmem:[#allocation13 + $0x8] sm:$0xff]
    %v602 = vld [vmem:[#allocation13 + $0x10] sm:$0xff]
    %v603 = vld [vmem:[#allocation13 + $0x18] sm:$0xff]
    %v604 = vld [vmem:[#allocation13 + $0x20] sm:$0xff]
    %v605 = vld [vmem:[#allocation13 + $0x28] sm:$0xff]
    %v606 = vld [vmem:[#allocation13 + $0x30] sm:$0xff]
    %v607 = vld [vmem:[#allocation13 + $0x38] sm:$0xff]
    %v608 = vld [vmem:[#allocation13 + $0x40] sm:$0xff]
    %v609 = vld [vmem:[#allocation13 + $0x48] sm:$0xff]
    %v610 = vld [vmem:[#allocation13 + $0x50] sm:$0xff]
    %v611 = vld [vmem:[#allocation13 + $0x58] sm:$0xff]
    %v612 = vld [vmem:[#allocation13 + $0x60] sm:$0xff]
    %v613 = vld [vmem:[#allocation13 + $0x68] sm:$0xff]
    %v614 = vld [vmem:[#allocation13 + $0x70] sm:$0xff]
    %v615 = vld [vmem:[#allocation13 + $0x78] sm:$0xff]
    %v616 = vld [vmem:[%s12] sm:$0x1]
    %v618 = vlaneseq
    %v619 = vshrl.u32 %v618, 7
    %v620 = vsub.s32 0, %v619
    %v621 = vrot.slane %v616, %v620
    %623 = vmatprep.subr.mxu0 0.0
    %624 = vmatpush1.msra.mxu0 %v600
    %625 = vmatprep.subr.mxu0 0.0
    %626 = vmatpush1.msra.mxu0 %v601
    %627 = vmatprep.subr.mxu0 0.0
    %628 = vmatpush1.msra.mxu0 %v602
    %629 = vmatprep.subr.mxu0 0.0
    %630 = vmatpush1.msra.mxu0 %v603
    %631 = vmatprep.subr.mxu0 0.0
    %632 = vmatpush1.msra.mxu0 %v604
    %633 = vmatprep.subr.mxu0 0.0
    %634 = vmatpush1.msra.mxu0 %v605
    %635 = vmatprep.subr.mxu0 0.0
    %636 = vmatpush1.msra.mxu0 %v606
    %637 = vmatprep.subr.mxu0 0.0
    %638 = vmatpush1.msra.mxu0 %v607
    %639 = vmatprep.subr.mxu0 0.0
    %640 = vmatpush1.msra.mxu0 %v608
    %641 = vmatprep.subr.mxu0 0.0
    %642 = vmatpush1.msra.mxu0 %v609
    %643 = vmatprep.subr.mxu0 0.0
    %644 = vmatpush1.msra.mxu0 %v610
    %645 = vmatprep.subr.mxu0 0.0
    %646 = vmatpush1.msra.mxu0 %v611
    %647 = vmatprep.subr.mxu0 0.0
    %648 = vmatpush1.msra.mxu0 %v612
    %649 = vmatprep.subr.mxu0 0.0
    %650 = vmatpush1.msra.mxu0 %v613
    %651 = vmatprep.subr.mxu0 0.0
    %652 = vmatpush1.msra.mxu0 %v614
    %653 = vmatprep.subr.mxu0 0.0
    %654 = vmatpush1.msra.mxu0 %v615
    %655 = vmatprep.subr.mxu0 0.0
    %656 = vmatpush1.msra.mxu0 0.0
    %657 = vmatprep.subr.mxu0 0.0
    %658 = vmatpush1.msra.mxu0 0.0
    %659 = vmatprep.subr.mxu0 0.0
    %660 = vmatpush1.msra.mxu0 0.0
    %661 = vmatprep.subr.mxu0 0.0
    %662 = vmatpush1.msra.mxu0 0.0
    %663 = vmatprep.subr.mxu0 0.0
    %664 = vmatpush1.msra.mxu0 0.0
    %665 = vmatprep.subr.mxu0 0.0
    %666 = vmatpush1.msra.mxu0 0.0
    %667 = vmatprep.subr.mxu0 0.0
    %668 = vmatpush1.msra.mxu0 0.0
    %669 = vmatprep.subr.mxu0 0.0
    %670 = vmatpush1.msra.mxu0 0.0
    %671 = vmatprep.subr.mxu0 0.0
    %672 = vmatpush1.msra.mxu0 0.0
    %673 = vmatprep.subr.mxu0 0.0
    %674 = vmatpush1.msra.mxu0 0.0
    %675 = vmatprep.subr.mxu0 0.0
    %676 = vmatpush1.msra.mxu0 0.0
    %677 = vmatprep.subr.mxu0 0.0
    %678 = vmatpush1.msra.mxu0 0.0
    %679 = vmatprep.subr.mxu0 0.0
    %680 = vmatpush1.msra.mxu0 0.0
    %681 = vmatprep.subr.mxu0 0.0
    %682 = vmatpush1.msra.mxu0 0.0
    %683 = vmatprep.subr.mxu0 0.0
    %684 = vmatpush1.msra.mxu0 0.0
    %685 = vmatprep.subr.mxu0 0.0
    %686 = vmatpush1.msra.mxu0 0.0
    %687 = vmatprep.mubr.f32.mxu0 0.0
    %688 = vmatmul.mubr.f32.gmra.mrb[0].mxu0 %v599
    %v689 = vpop.f32.mrb[0].mxu0
    %v690 = vadd.f32 %v621, %v689
    %v691 = vpop.f32.mrb[0].mxu0
    %692 = vdwg.mxu0
    %v693 = vmax.f32 %v690, 0.0
    %694 = vst [vmem:[#allocation14] sm:$0xff] %v693
    // Predicated region
    $region82: #{sdae_forward.1} parent=1 // pred_check
      _
    $region83: #{sdae_forward.1} parent=1 // pred_check_branch
      %696 = sbr.rel (0) target = $region85
    $region84: #{sdae_forward.1} parent=1 // pred_region
      %s698 = ssub.s32 128, 128
      %699 = vsyncadd [#allocation4], %s698
      %s701 = sshll.u32 [#allocation14], 4
      %s702 = int_to_ptr.vmem [resolvable:$true] %s701
      %704 = dma.vmem_to_hbm [thread:$0]  %s702, 128, %s13, [#allocation4]
    $region85: #{sdae_forward.1} parent=1 // pred_fallthru
      _
    // Predicated region
    $region86: #{sdae_forward.1} parent=1 // pred_check
      _
    $region87: #{sdae_forward.1} parent=1 // pred_check_branch
      %706 = sbr.rel (0) target = $region89
    $region88: #{sdae_forward.1} parent=1 // pred_region
      %707 = dma.done [#allocation4], 128
    $region89: #{sdae_forward.1} parent=1 // pred_fallthru
      _
    %708 = vsyncpa [#allocation3], 1
    %709 = vsyncpa [#allocation6], 1
    %710 = vsyncpa [#allocation9], 1
    %711 = vsyncpa [#allocation12], 1
    %712 = vsyncpa [#allocation4], 1

// kernel: sdae_forward.1
$region0: #{sdae_forward.1}
  #allocation0 [shape = 'u32[]', space=smem, size = 0x4, offset = 0x4, fixed_abs, tag = 'smem constant byte address 0x4 - core index']
  #allocation1 [shape = 'u32[144,128]{1,0:T(1,128)}', space=vmem, size = 0x12000, scoped, tag = 'internal scratch']
  %s0 = inlined_call_operand.hbm [shape: f32[8,32], index: 0, kind: input, shape index: {}]
  %s1 = inlined_call_operand.hbm [shape: f32[32,128], index: 1, kind: input, shape index: {}]
  %s2 = inlined_call_operand.vmem [shape: f32[1,128], index: 2, kind: input, shape index: {}]
  %s3 = inlined_call_operand.hbm [shape: f32[128,128], index: 3, kind: input, shape index: {}]
  %s4 = inlined_call_operand.vmem [shape: f32[1,128], index: 4, kind: input, shape index: {}]
  %s5 = inlined_call_operand.hbm [shape: f32[128,128], index: 5, kind: input, shape index: {}]
  %s6 = inlined_call_operand.vmem [shape: f32[1,128], index: 6, kind: input, shape index: {}]
  %s7 = inlined_call_operand.hbm [shape: f32[128,128], index: 7, kind: input, shape index: {}]
  %s8 = inlined_call_operand.vmem [shape: f32[1,128], index: 8, kind: input, shape index: {}]
  %s9 = inlined_call_operand.hbm [shape: f32[128,128], index: 9, kind: input, shape index: {}]
  %s10 = inlined_call_operand.vmem [shape: f32[1,128], index: 10, kind: input, shape index: {}]
  %s11 = inlined_call_operand.hbm [shape: f32[128,128], index: 11, kind: input, shape index: {}]
  %s12 = inlined_call_operand.vmem [shape: f32[1,128], index: 12, kind: input, shape index: {}]
  %s13 = inlined_call_operand.hbm [shape: f32[8,128], index: 13, kind: output, shape index: {}]
  %s14 = sld [smem:[#allocation0]]
  $region90: #{sdae_forward.1} parent=0
    _
  %s16 = ssub.s32 1, %s14
  %s17 = scalar_select 0, %s16, %s14
  $region1: #{sdae_forward.1} parent=0
    #allocation2 [shape = 'u8[4096]{0}', space=vmem, size = 0x1000, scoped, tag = 'input window, operand 0, single buffered']
    #allocation3 [shape = 's32[1]{0}', space=sflag, size = 0x4, scoped, tag = 'scoped memory for sdae_forward.1']
    #allocation4 [shape = 's32[1]{0}', space=sflag, size = 0x4, scoped, tag = 'scoped memory for sdae_forward.1']
    #allocation5 [shape = 'u8[16384]{0}', space=vmem, size = 0x4000, scoped, tag = 'input window, operand 1, single buffered']
    #allocation6 [shape = 's32[1]{0}', space=sflag, size = 0x4, scoped, tag = 'scoped memory for sdae_forward.1']
    #allocation7 [shape = 'u8[65536]{0}', space=vmem, size = 0x10000, scoped, tag = 'input window, operand 3, single buffered']
    #allocation8 [shape = 'u8[65536]{0}', space=vmem, size = 0x10000, scoped, tag = 'input window, operand 5, single buffered']
    #allocation9 [shape = 's32[1]{0}', space=sflag, size = 0x4, scoped, tag = 'scoped memory for sdae_forward.1']
    #allocation10 [shape = 'u8[65536]{0}', space=vmem, size = 0x10000, scoped, tag = 'input window, operand 7, single buffered']
    #allocation11 [shape = 'u8[65536]{0}', space=vmem, size = 0x10000, scoped, tag = 'input window, operand 9, single buffered']
    #allocation12 [shape = 's32[1]{0}', space=sflag, size = 0x4, scoped, tag = 'scoped memory for sdae_forward.1']
    #allocation13 [shape = 'u8[65536]{0}', space=vmem, size = 0x10000, scoped, tag = 'input window, operand 11, single buffered']
    #allocation14 [shape = 'u8[4096]{0}', space=vmem, size = 0x1000, scoped, tag = 'output window, operand 0, single buffered']
    %18 = vsyncpa [#allocation3], 0
    %19 = vsyncpa [#allocation6], 0
    %20 = vsyncpa [#allocation9], 0
    %21 = vsyncpa [#allocation12], 0
    %22 = vsyncpa [#allocation4], 0
    // Predicated region
    $region2: #{sdae_forward.1} parent=1 // pred_check
      _
    $region3: #{sdae_forward.1} parent=1 // pred_check_branch
      %24 = sbr.rel (0) target = $region5
    $region4: #{sdae_forward.1} parent=1 // pred_region
      %s26 = ssub.s32 128, 128
      %27 = vsyncadd [#allocation3], %s26
      %s29 = sshll.u32 [#allocation2], 4
      %s30 = int_to_ptr.vmem [resolvable:$true] %s29
      %32 = dma.hbm_to_vmem [thread:$0]  %s0, 128, %s30, [#allocation3]
    $region5: #{sdae_forward.1} parent=1 // pred_fallthru
      _
    // Predicated region
    $region6: #{sdae_forward.1} parent=1 // pred_check
      _
    $region7: #{sdae_forward.1} parent=1 // pred_check_branch
      %34 = sbr.rel (0) target = $region9
    $region8: #{sdae_forward.1} parent=1 // pred_region
      %s36 = ssub.s32 512, 512
      %37 = vsyncadd [#allocation6], %s36
      %s38 = sshll.u32 [#allocation5], 4
      %s39 = int_to_ptr.vmem [resolvable:$true] %s38
      %44 = dma.hbm_to_vmem [thread:$0]  %s1, 512, %s39, [#allocation6], 128, 128, 8
    $region9: #{sdae_forward.1} parent=1 // pred_fallthru
      _
    // Predicated region
    $region10: #{sdae_forward.1} parent=1 // pred_check
      _
    $region11: #{sdae_forward.1} parent=1 // pred_check_branch
      %46 = sbr.rel (0) target = $region13
    $region12: #{sdae_forward.1} parent=1 // pred_region
      _
    $region13: #{sdae_forward.1} parent=1 // pred_fallthru
      _
    // Predicated region
    $region14: #{sdae_forward.1} parent=1 // pred_check
      _
    $region15: #{sdae_forward.1} parent=1 // pred_check_branch
      %48 = sbr.rel (0) target = $region17
    $region16: #{sdae_forward.1} parent=1 // pred_region
      %s50 = ssub.s32 2048, 2048
      %51 = vsyncadd [#allocation6], %s50
      %s52 = sshll.u32 [#allocation7], 4
      %s53 = int_to_ptr.vmem [resolvable:$true] %s52
      %58 = dma.hbm_to_vmem [thread:$0]  %s3, 2048, %s53, [#allocation6], 128, 128, 8
    $region17: #{sdae_forward.1} parent=1 // pred_fallthru
      _
    // Predicated region
    $region18: #{sdae_forward.1} parent=1 // pred_check
      _
    $region19: #{sdae_forward.1} parent=1 // pred_check_branch
      %60 = sbr.rel (0) target = $region21
    $region20: #{sdae_forward.1} parent=1 // pred_region
      _
    $region21: #{sdae_forward.1} parent=1 // pred_fallthru
      _
    // Predicated region
    $region22: #{sdae_forward.1} parent=1 // pred_check
      _
    $region23: #{sdae_forward.1} parent=1 // pred_check_branch
      %62 = sbr.rel (0) target = $region25
    $region24: #{sdae_forward.1} parent=1 // pred_region
      %s64 = ssub.s32 2048, 2048
      %65 = vsyncadd [#allocation9], %s64
      %s66 = sshll.u32 [#allocation8], 4
      %s67 = int_to_ptr.vmem [resolvable:$true] %s66
      %72 = dma.hbm_to_vmem [thread:$0]  %s5, 2048, %s67, [#allocation9], 128, 128, 8
    $region25: #{sdae_forward.1} parent=1 // pred_fallthru
      _
    // Predicated region
    $region26: #{sdae_forward.1} parent=1 // pred_check
      _
    $region27: #{sdae_forward.1} parent=1 // pred_check_branch
      %74 = sbr.rel (0) target = $region29
    $region28: #{sdae_forward.1} parent=1 // pred_region
      _
    $region29: #{sdae_forward.1} parent=1 // pred_fallthru
      _
    // Predicated region
    $region30: #{sdae_forward.1} parent=1 // pred_check
      _
    $region31: #{sdae_forward.1} parent=1 // pred_check_branch
      %76 = sbr.rel (0) target = $region33
    $region32: #{sdae_forward.1} parent=1 // pred_region
      %s78 = ssub.s32 2048, 2048
      %79 = vsyncadd [#allocation9], %s78
      %s80 = sshll.u32 [#allocation10], 4
      %s81 = int_to_ptr.vmem [resolvable:$true] %s80
      %86 = dma.hbm_to_vmem [thread:$0]  %s7, 2048, %s81, [#allocation9], 128, 128, 8
    $region33: #{sdae_forward.1} parent=1 // pred_fallthru
      _
    // Predicated region
    $region34: #{sdae_forward.1} parent=1 // pred_check
      _
    $region35: #{sdae_forward.1} parent=1 // pred_check_branch
      %88 = sbr.rel (0) target = $region37
    $region36: #{sdae_forward.1} parent=1 // pred_region
      _
    $region37: #{sdae_forward.1} parent=1 // pred_fallthru
      _
    // Predicated region
    $region38: #{sdae_forward.1} parent=1 // pred_check
      _
    $region39: #{sdae_forward.1} parent=1 // pred_check_branch
      %90 = sbr.rel (0) target = $region41
    $region40: #{sdae_forward.1} parent=1 // pred_region
      %s92 = ssub.s32 2048, 2048
      %93 = vsyncadd [#allocation12], %s92
      %s94 = sshll.u32 [#allocation11], 4
      %s95 = int_to_ptr.vmem [resolvable:$true] %s94
      %100 = dma.hbm_to_vmem [thread:$0]  %s9, 2048, %s95, [#allocation12], 128, 128, 8
    $region41: #{sdae_forward.1} parent=1 // pred_fallthru
      _
    // Predicated region
    $region42: #{sdae_forward.1} parent=1 // pred_check
      _
    $region43: #{sdae_forward.1} parent=1 // pred_check_branch
      %102 = sbr.rel (0) target = $region45
    $region44: #{sdae_forward.1} parent=1 // pred_region
      _
    $region45: #{sdae_forward.1} parent=1 // pred_fallthru
      _
    // Predicated region
    $region46: #{sdae_forward.1} parent=1 // pred_check
      _
    $region47: #{sdae_forward.1} parent=1 // pred_check_branch
      %104 = sbr.rel (0) target = $region49
    $region48: #{sdae_forward.1} parent=1 // pred_region
      %s106 = ssub.s32 2048, 2048
      %107 = vsyncadd [#allocation12], %s106
      %s108 = sshll.u32 [#allocation13], 4
      %s109 = int_to_ptr.vmem [resolvable:$true] %s108
      %114 = dma.hbm_to_vmem [thread:$0]  %s11, 2048, %s109, [#allocation12], 128, 128, 8
    $region49: #{sdae_forward.1} parent=1 // pred_fallthru
      _
    // Predicated region
    $region50: #{sdae_forward.1} parent=1 // pred_check
      _
    $region51: #{sdae_forward.1} parent=1 // pred_check_branch
      %116 = sbr.rel (0) target = $region53
    $region52: #{sdae_forward.1} parent=1 // pred_region
      _
    $region53: #{sdae_forward.1} parent=1 // pred_fallthru
      _
    // Predicated region
    $region54: #{sdae_forward.1} parent=1 // pred_check
      _
    $region55: #{sdae_forward.1} parent=1 // pred_check_branch
      %118 = sbr.rel (0) target = $region57
    $region56: #{sdae_forward.1} parent=1 // pred_region
      %119 = dma.done [#allocation3], 128
    $region57: #{sdae_forward.1} parent=1 // pred_fallthru
      _
    // Predicated region
    $region58: #{sdae_forward.1} parent=1 // pred_check
      _
    $region59: #{sdae_forward.1} parent=1 // pred_check_branch
      %121 = sbr.rel (0) target = $region61
    $region60: #{sdae_forward.1} parent=1 // pred_region
      %122 = dma.done [#allocation6], 512
    $region61: #{sdae_forward.1} parent=1 // pred_fallthru
      _
    // Predicated region
    $region62: #{sdae_forward.1} parent=1 // pred_check
      _
    $region63: #{sdae_forward.1} parent=1 // pred_check_branch
      %124 = sbr.rel (0) target = $region65
    $region64: #{sdae_forward.1} parent=1 // pred_region
      %125 = dma.done [#allocation6], 2048
    $region65: #{sdae_forward.1} parent=1 // pred_fallthru
      _
    // Predicated region
    $region66: #{sdae_forward.1} parent=1 // pred_check
      _
    $region67: #{sdae_forward.1} parent=1 // pred_check_branch
      %127 = sbr.rel (0) target = $region69
    $region68: #{sdae_forward.1} parent=1 // pred_region
      %128 = dma.done [#allocation9], 2048
    $region69: #{sdae_forward.1} parent=1 // pred_fallthru
      _
    // Predicated region
    $region70: #{sdae_forward.1} parent=1 // pred_check
      _
    $region71: #{sdae_forward.1} parent=1 // pred_check_branch
      %130 = sbr.rel (0) target = $region73
    $region72: #{sdae_forward.1} parent=1 // pred_region
      %131 = dma.done [#allocation9], 2048
    $region73: #{sdae_forward.1} parent=1 // pred_fallthru
      _
    // Predicated region
    $region74: #{sdae_forward.1} parent=1 // pred_check
      _
    $region75: #{sdae_forward.1} parent=1 // pred_check_branch
      %133 = sbr.rel (0) target = $region77
    $region76: #{sdae_forward.1} parent=1 // pred_region
      %134 = dma.done [#allocation12], 2048
    $region77: #{sdae_forward.1} parent=1 // pred_fallthru
      _
    // Predicated region
    $region78: #{sdae_forward.1} parent=1 // pred_check
      _
    $region79: #{sdae_forward.1} parent=1 // pred_check_branch
      %136 = sbr.rel (0) target = $region81
    $region80: #{sdae_forward.1} parent=1 // pred_region
      %137 = dma.done [#allocation12], 2048
    $region81: #{sdae_forward.1} parent=1 // pred_fallthru
      _
    %v138 = vld [vmem:[#allocation2] sm:$0xff]
    %v139 = vld [vmem:[#allocation5] sm:$0xff]
    %v140 = vld [vmem:[#allocation5 + $0x8] sm:$0xff]
    %v141 = vld [vmem:[#allocation5 + $0x10] sm:$0xff]
    %v142 = vld [vmem:[#allocation5 + $0x18] sm:$0xff]
    %v143 = vld [vmem:[%s2] sm:$0x1]
    %v145 = vlaneseq
    %v146 = vshrl.u32 %v145, 7
    %v147 = vsub.s32 0, %v146
    %v148 = vrot.slane %v143, %v147
    %vm150 = vcmask 261120
    %v152 = vsel %vm150, %v138, 0
    %154 = vmatprep.subr.mxu0 0.0
    %155 = vmatpush1.msra.mxu0 %v139
    %156 = vmatprep.subr.mxu0 0.0
    %157 = vmatpush1.msra.mxu0 %v140
    %158 = vmatprep.subr.mxu0 0.0
    %159 = vmatpush1.msra.mxu0 %v141
    %160 = vmatprep.subr.mxu0 0.0
    %161 = vmatpush1.msra.mxu0 %v142
    %162 = vmatprep.subr.mxu0 0.0
    %163 = vmatpush1.msra.mxu0 0.0
    %164 = vmatprep.subr.mxu0 0.0
    %165 = vmatpush1.msra.mxu0 0.0
    %166 = vmatprep.subr.mxu0 0.0
    %167 = vmatpush1.msra.mxu0 0.0
    %168 = vmatprep.subr.mxu0 0.0
    %169 = vmatpush1.msra.mxu0 0.0
    %170 = vmatprep.subr.mxu0 0.0
    %171 = vmatpush1.msra.mxu0 0.0
    %172 = vmatprep.subr.mxu0 0.0
    %173 = vmatpush1.msra.mxu0 0.0
    %174 = vmatprep.subr.mxu0 0.0
    %175 = vmatpush1.msra.mxu0 0.0
    %176 = vmatprep.subr.mxu0 0.0
    %177 = vmatpush1.msra.mxu0 0.0
    %178 = vmatprep.subr.mxu0 0.0
    %179 = vmatpush1.msra.mxu0 0.0
    %180 = vmatprep.subr.mxu0 0.0
    %181 = vmatpush1.msra.mxu0 0.0
    %182 = vmatprep.subr.mxu0 0.0
    %183 = vmatpush1.msra.mxu0 0.0
    %184 = vmatprep.subr.mxu0 0.0
    %185 = vmatpush1.msra.mxu0 0.0
    %186 = vmatprep.subr.mxu0 0.0
    %187 = vmatpush1.msra.mxu0 0.0
    %188 = vmatprep.subr.mxu0 0.0
    %189 = vmatpush1.msra.mxu0 0.0
    %190 = vmatprep.subr.mxu0 0.0
    %191 = vmatpush1.msra.mxu0 0.0
    %192 = vmatprep.subr.mxu0 0.0
    %193 = vmatpush1.msra.mxu0 0.0
    %194 = vmatprep.subr.mxu0 0.0
    %195 = vmatpush1.msra.mxu0 0.0
    %196 = vmatprep.subr.mxu0 0.0
    %197 = vmatpush1.msra.mxu0 0.0
    %198 = vmatprep.subr.mxu0 0.0
    %199 = vmatpush1.msra.mxu0 0.0
    %200 = vmatprep.subr.mxu0 0.0
    %201 = vmatpush1.msra.mxu0 0.0
    %202 = vmatprep.subr.mxu0 0.0
    %203 = vmatpush1.msra.mxu0 0.0
    %204 = vmatprep.subr.mxu0 0.0
    %205 = vmatpush1.msra.mxu0 0.0
    %206 = vmatprep.subr.mxu0 0.0
    %207 = vmatpush1.msra.mxu0 0.0
    %208 = vmatprep.subr.mxu0 0.0
    %209 = vmatpush1.msra.mxu0 0.0
    %210 = vmatprep.subr.mxu0 0.0
    %211 = vmatpush1.msra.mxu0 0.0
    %212 = vmatprep.subr.mxu0 0.0
    %213 = vmatpush1.msra.mxu0 0.0
    %214 = vmatprep.subr.mxu0 0.0
    %215 = vmatpush1.msra.mxu0 0.0
    %216 = vmatprep.subr.mxu0 0.0
    %217 = vmatpush1.msra.mxu0 0.0
    %218 = vmatprep.mubr.f32.mxu0 0.0
    %219 = vmatmul.mubr.f32.gmra.mrb[0].mxu0 %v152
    %v220 = vpop.f32.mrb[0].mxu0
    %v221 = vadd.f32 %v148, %v220
    %v222 = vpop.f32.mrb[0].mxu0
    %223 = vdwg.mxu0
    %v224 = vmax.f32 %v221, 0.0
    %v225 = vld [vmem:[#allocation7] sm:$0xff]
    %v226 = vld [vmem:[#allocation7 + $0x8] sm:$0xff]
    %v227 = vld [vmem:[#allocation7 + $0x10] sm:$0xff]
    %v228 = vld [vmem:[#allocation7 + $0x18] sm:$0xff]
    %v229 = vld [vmem:[#allocation7 + $0x20] sm:$0xff]
    %v230 = vld [vmem:[#allocation7 + $0x28] sm:$0xff]
    %v231 = vld [vmem:[#allocation7 + $0x30] sm:$0xff]
    %v232 = vld [vmem:[#allocation7 + $0x38] sm:$0xff]
    %v233 = vld [vmem:[#allocation7 + $0x40] sm:$0xff]
    %v234 = vld [vmem:[#allocation7 + $0x48] sm:$0xff]
    %v235 = vld [vmem:[#allocation7 + $0x50] sm:$0xff]
    %v236 = vld [vmem:[#allocation7 + $0x58] sm:$0xff]
    %v237 = vld [vmem:[#allocation7 + $0x60] sm:$0xff]
    %v238 = vld [vmem:[#allocation7 + $0x68] sm:$0xff]
    %v239 = vld [vmem:[#allocation7 + $0x70] sm:$0xff]
    %v240 = vld [vmem:[#allocation7 + $0x78] sm:$0xff]
    %v241 = vld [vmem:[%s4] sm:$0x1]
    %v243 = vlaneseq
    %v244 = vshrl.u32 %v243, 7
    %v245 = vsub.s32 0, %v244
    %v246 = vrot.slane %v241, %v245
    %248 = vmatprep.subr.mxu0 0.0
    %249 = vmatpush1.msra.mxu0 %v225
    %250 = vmatprep.subr.mxu0 0.0
    %251 = vmatpush1.msra.mxu0 %v226
    %252 = vmatprep.subr.mxu0 0.0
    %253 = vmatpush1.msra.mxu0 %v227
    %254 = vmatprep.subr.mxu0 0.0
    %255 = vmatpush1.msra.mxu0 %v228
    %256 = vmatprep.subr.mxu0 0.0
    %257 = vmatpush1.msra.mxu0 %v229
    %258 = vmatprep.subr.mxu0 0.0
    %259 = vmatpush1.msra.mxu0 %v230
    %260 = vmatprep.subr.mxu0 0.0
    %261 = vmatpush1.msra.mxu0 %v231
    %262 = vmatprep.subr.mxu0 0.0
    %263 = vmatpush1.msra.mxu0 %v232
    %264 = vmatprep.subr.mxu0 0.0
    %265 = vmatpush1.msra.mxu0 %v233
    %266 = vmatprep.subr.mxu0 0.0
    %267 = vmatpush1.msra.mxu0 %v234
    %268 = vmatprep.subr.mxu0 0.0
    %269 = vmatpush1.msra.mxu0 %v235
    %270 = vmatprep.subr.mxu0 0.0
    %271 = vmatpush1.msra.mxu0 %v236
    %272 = vmatprep.subr.mxu0 0.0
    %273 = vmatpush1.msra.mxu0 %v237
    %274 = vmatprep.subr.mxu0 0.0
    %275 = vmatpush1.msra.mxu0 %v238
    %276 = vmatprep.subr.mxu0 0.0
    %277 = vmatpush1.msra.mxu0 %v239
    %278 = vmatprep.subr.mxu0 0.0
    %279 = vmatpush1.msra.mxu0 %v240
    %280 = vmatprep.subr.mxu0 0.0
    %281 = vmatpush1.msra.mxu0 0.0
    %282 = vmatprep.subr.mxu0 0.0
    %283 = vmatpush1.msra.mxu0 0.0
    %284 = vmatprep.subr.mxu0 0.0
    %285 = vmatpush1.msra.mxu0 0.0
    %286 = vmatprep.subr.mxu0 0.0
    %287 = vmatpush1.msra.mxu0 0.0
    %288 = vmatprep.subr.mxu0 0.0
    %289 = vmatpush1.msra.mxu0 0.0
    %290 = vmatprep.subr.mxu0 0.0
    %291 = vmatpush1.msra.mxu0 0.0
    %292 = vmatprep.subr.mxu0 0.0
    %293 = vmatpush1.msra.mxu0 0.0
    %294 = vmatprep.subr.mxu0 0.0
    %295 = vmatpush1.msra.mxu0 0.0
    %296 = vmatprep.subr.mxu0 0.0
    %297 = vmatpush1.msra.mxu0 0.0
    %298 = vmatprep.subr.mxu0 0.0
    %299 = vmatpush1.msra.mxu0 0.0
    %300 = vmatprep.subr.mxu0 0.0
    %301 = vmatpush1.msra.mxu0 0.0
    %302 = vmatprep.subr.mxu0 0.0
    %303 = vmatpush1.msra.mxu0 0.0
    %304 = vmatprep.subr.mxu0 0.0
    %305 = vmatpush1.msra.mxu0 0.0
    %306 = vmatprep.subr.mxu0 0.0
    %307 = vmatpush1.msra.mxu0 0.0
    %308 = vmatprep.subr.mxu0 0.0
    %309 = vmatpush1.msra.mxu0 0.0
    %310 = vmatprep.subr.mxu0 0.0
    %311 = vmatpush1.msra.mxu0 0.0
    %312 = vmatprep.mubr.f32.mxu0 0.0
    %313 = vmatmul.mubr.f32.gmra.mrb[0].mxu0 %v224
    %v314 = vpop.f32.mrb[0].mxu0
    %v315 = vadd.f32 %v246, %v314
    %v316 = vpop.f32.mrb[0].mxu0
    %317 = vdwg.mxu0
    %v318 = vmax.f32 %v315, 0.0
    %v319 = vld [vmem:[#allocation8] sm:$0xff]
    %v320 = vld [vmem:[#allocation8 + $0x8] sm:$0xff]
    %v321 = vld [vmem:[#allocation8 + $0x10] sm:$0xff]
    %v322 = vld [vmem:[#allocation8 + $0x18] sm:$0xff]
    %v323 = vld [vmem:[#allocation8 + $0x20] sm:$0xff]
    %v324 = vld [vmem:[#allocation8 + $0x28] sm:$0xff]
    %v325 = vld [vmem:[#allocation8 + $0x30] sm:$0xff]
    %v326 = vld [vmem:[#allocation8 + $0x38] sm:$0xff]
    %v327 = vld [vmem:[#allocation8 + $0x40] sm:$0xff]
    %v328 = vld [vmem:[#allocation8 + $0x48] sm:$0xff]
    %v329 = vld [vmem:[#allocation8 + $0x50] sm:$0xff]
    %v330 = vld [vmem:[#allocation8 + $0x58] sm:$0xff]
    %v331 = vld [vmem:[#allocation8 + $0x60] sm:$0xff]
    %v332 = vld [vmem:[#allocation8 + $0x68] sm:$0xff]
    %v333 = vld [vmem:[#allocation8 + $0x70] sm:$0xff]
    %v334 = vld [vmem:[#allocation8 + $0x78] sm:$0xff]
    %v335 = vld [vmem:[%s6] sm:$0x1]
    %v337 = vlaneseq
    %v338 = vshrl.u32 %v337, 7
    %v339 = vsub.s32 0, %v338
    %v340 = vrot.slane %v335, %v339
    %342 = vmatprep.subr.mxu0 0.0
    %343 = vmatpush1.msra.mxu0 %v319
    %344 = vmatprep.subr.mxu0 0.0
    %345 = vmatpush1.msra.mxu0 %v320
    %346 = vmatprep.subr.mxu0 0.0
    %347 = vmatpush1.msra.mxu0 %v321
    %348 = vmatprep.subr.mxu0 0.0
    %349 = vmatpush1.msra.mxu0 %v322
    %350 = vmatprep.subr.mxu0 0.0
    %351 = vmatpush1.msra.mxu0 %v323
    %352 = vmatprep.subr.mxu0 0.0
    %353 = vmatpush1.msra.mxu0 %v324
    %354 = vmatprep.subr.mxu0 0.0
    %355 = vmatpush1.msra.mxu0 %v325
    %356 = vmatprep.subr.mxu0 0.0
    %357 = vmatpush1.msra.mxu0 %v326
    %358 = vmatprep.subr.mxu0 0.0
    %359 = vmatpush1.msra.mxu0 %v327
    %360 = vmatprep.subr.mxu0 0.0
    %361 = vmatpush1.msra.mxu0 %v328
    %362 = vmatprep.subr.mxu0 0.0
    %363 = vmatpush1.msra.mxu0 %v329
    %364 = vmatprep.subr.mxu0 0.0
    %365 = vmatpush1.msra.mxu0 %v330
    %366 = vmatprep.subr.mxu0 0.0
    %367 = vmatpush1.msra.mxu0 %v331
    %368 = vmatprep.subr.mxu0 0.0
    %369 = vmatpush1.msra.mxu0 %v332
    %370 = vmatprep.subr.mxu0 0.0
    %371 = vmatpush1.msra.mxu0 %v333
    %372 = vmatprep.subr.mxu0 0.0
    %373 = vmatpush1.msra.mxu0 %v334
    %374 = vmatprep.subr.mxu0 0.0
    %375 = vmatpush1.msra.mxu0 0.0
    %376 = vmatprep.subr.mxu0 0.0
    %377 = vmatpush1.msra.mxu0 0.0
    %378 = vmatprep.subr.mxu0 0.0
    %379 = vmatpush1.msra.mxu0 0.0
    %380 = vmatprep.subr.mxu0 0.0
    %381 = vmatpush1.msra.mxu0 0.0
    %382 = vmatprep.subr.mxu0 0.0
    %383 = vmatpush1.msra.mxu0 0.0
    %384 = vmatprep.subr.mxu0 0.0
    %385 = vmatpush1.msra.mxu0 0.0
    %386 = vmatprep.subr.mxu0 0.0
    %387 = vmatpush1.msra.mxu0 0.0
    %388 = vmatprep.subr.mxu0 0.0
    %389 = vmatpush1.msra.mxu0 0.0
    %390 = vmatprep.subr.mxu0 0.0
    %391 = vmatpush1.msra.mxu0 0.0
    %392 = vmatprep.subr.mxu0 0.0
    %393 = vmatpush1.msra.mxu0 0.0
    %394 = vmatprep.subr.mxu0 0.0
    %395 = vmatpush1.msra.mxu0 0.0
    %396 = vmatprep.subr.mxu0 0.0
    %397 = vmatpush1.msra.mxu0 0.0
    %398 = vmatprep.subr.mxu0 0.0
    %399 = vmatpush1.msra.mxu0 0.0
    %400 = vmatprep.subr.mxu0 0.0
    %401 = vmatpush1.msra.mxu0 0.0
    %402 = vmatprep.subr.mxu0 0.0
    %403 = vmatpush1.msra.mxu0 0.0
    %404 = vmatprep.subr.mxu0 0.0
    %405 = vmatpush1.msra.mxu0 0.0
    %406 = vmatprep.mubr.f32.mxu0 0.0
    %407 = vmatmul.mubr.f32.gmra.mrb[0].mxu0 %v318
    %v408 = vpop.f32.mrb[0].mxu0
    %v409 = vadd.f32 %v340, %v408
    %v410 = vpop.f32.mrb[0].mxu0
    %411 = vdwg.mxu0
    %v412 = vld [vmem:[#allocation10] sm:$0xff]
    %v413 = vld [vmem:[#allocation10 + $0x8] sm:$0xff]
    %v414 = vld [vmem:[#allocation10 + $0x10] sm:$0xff]
    %v415 = vld [vmem:[#allocation10 + $0x18] sm:$0xff]
    %v416 = vld [vmem:[#allocation10 + $0x20] sm:$0xff]
    %v417 = vld [vmem:[#allocation10 + $0x28] sm:$0xff]
    %v418 = vld [vmem:[#allocation10 + $0x30] sm:$0xff]
    %v419 = vld [vmem:[#allocation10 + $0x38] sm:$0xff]
    %v420 = vld [vmem:[#allocation10 + $0x40] sm:$0xff]
    %v421 = vld [vmem:[#allocation10 + $0x48] sm:$0xff]
    %v422 = vld [vmem:[#allocation10 + $0x50] sm:$0xff]
    %v423 = vld [vmem:[#allocation10 + $0x58] sm:$0xff]
    %v424 = vld [vmem:[#allocation10 + $0x60] sm:$0xff]
    %v425 = vld [vmem:[#allocation10 + $0x68] sm:$0xff]
    %v426 = vld [vmem:[#allocation10 + $0x70] sm:$0xff]
    %v427 = vld [vmem:[#allocation10 + $0x78] sm:$0xff]
    %v428 = vld [vmem:[%s8] sm:$0x1]
    %v430 = vlaneseq
    %v431 = vshrl.u32 %v430, 7
    %v432 = vsub.s32 0, %v431
    %v433 = vrot.slane %v428, %v432
    %435 = vmatprep.subr.mxu0 0.0
    %436 = vmatpush1.msra.mxu0 %v412
    %437 = vmatprep.subr.mxu0 0.0
    %438 = vmatpush1.msra.mxu0 %v413
    %439 = vmatprep.subr.mxu0 0.0
    %440 = vmatpush1.msra.mxu0 %v414
    %441 = vmatprep.subr.mxu0 0.0
    %442 = vmatpush1.msra.mxu0 %v415
    %443 = vmatprep.subr.mxu0 0.0
    %444 = vmatpush1.msra.mxu0 %v416
    %445 = vmatprep.subr.mxu0 0.0
    %446 = vmatpush1.msra.mxu0 %v417
    %447 = vmatprep.subr.mxu0 0.0
    %448 = vmatpush1.msra.mxu0 %v418
    %449 = vmatprep.subr.mxu0 0.0
    %450 = vmatpush1.msra.mxu0 %v419
    %451 = vmatprep.subr.mxu0 0.0
    %452 = vmatpush1.msra.mxu0 %v420
    %453 = vmatprep.subr.mxu0 0.0
    %454 = vmatpush1.msra.mxu0 %v421
    %455 = vmatprep.subr.mxu0 0.0
    %456 = vmatpush1.msra.mxu0 %v422
    %457 = vmatprep.subr.mxu0 0.0
    %458 = vmatpush1.msra.mxu0 %v423
    %459 = vmatprep.subr.mxu0 0.0
    %460 = vmatpush1.msra.mxu0 %v424
    %461 = vmatprep.subr.mxu0 0.0
    %462 = vmatpush1.msra.mxu0 %v425
    %463 = vmatprep.subr.mxu0 0.0
    %464 = vmatpush1.msra.mxu0 %v426
    %465 = vmatprep.subr.mxu0 0.0
    %466 = vmatpush1.msra.mxu0 %v427
    %467 = vmatprep.subr.mxu0 0.0
    %468 = vmatpush1.msra.mxu0 0.0
    %469 = vmatprep.subr.mxu0 0.0
    %470 = vmatpush1.msra.mxu0 0.0
    %471 = vmatprep.subr.mxu0 0.0
    %472 = vmatpush1.msra.mxu0 0.0
    %473 = vmatprep.subr.mxu0 0.0
    %474 = vmatpush1.msra.mxu0 0.0
    %475 = vmatprep.subr.mxu0 0.0
    %476 = vmatpush1.msra.mxu0 0.0
    %477 = vmatprep.subr.mxu0 0.0
    %478 = vmatpush1.msra.mxu0 0.0
    %479 = vmatprep.subr.mxu0 0.0
    %480 = vmatpush1.msra.mxu0 0.0
    %481 = vmatprep.subr.mxu0 0.0
    %482 = vmatpush1.msra.mxu0 0.0
    %483 = vmatprep.subr.mxu0 0.0
    %484 = vmatpush1.msra.mxu0 0.0
    %485 = vmatprep.subr.mxu0 0.0
    %486 = vmatpush1.msra.mxu0 0.0
    %487 = vmatprep.subr.mxu0 0.0
    %488 = vmatpush1.msra.mxu0 0.0
    %489 = vmatprep.subr.mxu0 0.0
    %490 = vmatpush1.msra.mxu0 0.0
    %491 = vmatprep.subr.mxu0 0.0
    %492 = vmatpush1.msra.mxu0 0.0
    %493 = vmatprep.subr.mxu0 0.0
    %494 = vmatpush1.msra.mxu0 0.0
    %495 = vmatprep.subr.mxu0 0.0
    %496 = vmatpush1.msra.mxu0 0.0
    %497 = vmatprep.subr.mxu0 0.0
    %498 = vmatpush1.msra.mxu0 0.0
    %499 = vmatprep.mubr.f32.mxu0 0.0
    %500 = vmatmul.mubr.f32.gmra.mrb[0].mxu0 %v409
    %v501 = vpop.f32.mrb[0].mxu0
    %v502 = vadd.f32 %v433, %v501
    %v503 = vpop.f32.mrb[0].mxu0
    %504 = vdwg.mxu0
    %v505 = vmax.f32 %v502, 0.0
    %v506 = vld [vmem:[#allocation11] sm:$0xff]
    %v507 = vld [vmem:[#allocation11 + $0x8] sm:$0xff]
    %v508 = vld [vmem:[#allocation11 + $0x10] sm:$0xff]
    %v509 = vld [vmem:[#allocation11 + $0x18] sm:$0xff]
    %v510 = vld [vmem:[#allocation11 + $0x20] sm:$0xff]
    %v511 = vld [vmem:[#allocation11 + $0x28] sm:$0xff]
    %v512 = vld [vmem:[#allocation11 + $0x30] sm:$0xff]
    %v513 = vld [vmem:[#allocation11 + $0x38] sm:$0xff]
    %v514 = vld [vmem:[#allocation11 + $0x40] sm:$0xff]
    %v515 = vld [vmem:[#allocation11 + $0x48] sm:$0xff]
    %v516 = vld [vmem:[#allocation11 + $0x50] sm:$0xff]
    %v517 = vld [vmem:[#allocation11 + $0x58] sm:$0xff]
    %v518 = vld [vmem:[#allocation11 + $0x60] sm:$0xff]
    %v519 = vld [vmem:[#allocation11 + $0x68] sm:$0xff]
    %v520 = vld [vmem:[#allocation11 + $0x70] sm:$0xff]
    %v521 = vld [vmem:[#allocation11 + $0x78] sm:$0xff]
    %v522 = vld [vmem:[%s10] sm:$0x1]
    %v524 = vlaneseq
    %v525 = vshrl.u32 %v524, 7
    %v526 = vsub.s32 0, %v525
    %v527 = vrot.slane %v522, %v526
    %529 = vmatprep.subr.mxu0 0.0
    %530 = vmatpush1.msra.mxu0 %v506
    %531 = vmatprep.subr.mxu0 0.0
    %532 = vmatpush1.msra.mxu0 %v507
    %533 = vmatprep.subr.mxu0 0.0
    %534 = vmatpush1.msra.mxu0 %v508
    %535 = vmatprep.subr.mxu0 0.0
    %536 = vmatpush1.msra.mxu0 %v509
    %537 = vmatprep.subr.mxu0 0.0
    %538 = vmatpush1.msra.mxu0 %v510
    %539 = vmatprep.subr.mxu0 0.0
    %540 = vmatpush1.msra.mxu0 %v511
    %541 = vmatprep.subr.mxu0 0.0
    %542 = vmatpush1.msra.mxu0 %v512
    %543 = vmatprep.subr.mxu0 0.0
    %544 = vmatpush1.msra.mxu0 %v513
    %545 = vmatprep.subr.mxu0 0.0
    %546 = vmatpush1.msra.mxu0 %v514
    %547 = vmatprep.subr.mxu0 0.0
    %548 = vmatpush1.msra.mxu0 %v515
    %549 = vmatprep.subr.mxu0 0.0
    %550 = vmatpush1.msra.mxu0 %v516
    %551 = vmatprep.subr.mxu0 0.0
    %552 = vmatpush1.msra.mxu0 %v517
    %553 = vmatprep.subr.mxu0 0.0
    %554 = vmatpush1.msra.mxu0 %v518
    %555 = vmatprep.subr.mxu0 0.0
    %556 = vmatpush1.msra.mxu0 %v519
    %557 = vmatprep.subr.mxu0 0.0
    %558 = vmatpush1.msra.mxu0 %v520
    %559 = vmatprep.subr.mxu0 0.0
    %560 = vmatpush1.msra.mxu0 %v521
    %561 = vmatprep.subr.mxu0 0.0
    %562 = vmatpush1.msra.mxu0 0.0
    %563 = vmatprep.subr.mxu0 0.0
    %564 = vmatpush1.msra.mxu0 0.0
    %565 = vmatprep.subr.mxu0 0.0
    %566 = vmatpush1.msra.mxu0 0.0
    %567 = vmatprep.subr.mxu0 0.0
    %568 = vmatpush1.msra.mxu0 0.0
    %569 = vmatprep.subr.mxu0 0.0
    %570 = vmatpush1.msra.mxu0 0.0
    %571 = vmatprep.subr.mxu0 0.0
    %572 = vmatpush1.msra.mxu0 0.0
    %573 = vmatprep.subr.mxu0 0.0
    %574 = vmatpush1.msra.mxu0 0.0
    %575 = vmatprep.subr.mxu0 0.0
    %576 = vmatpush1.msra.mxu0 0.0
    %577 = vmatprep.subr.mxu0 0.0
    %578 = vmatpush1.msra.mxu0 0.0
    %579 = vmatprep.subr.mxu0 0.0
    %580 = vmatpush1.msra.mxu0 0.0
    %581 = vmatprep.subr.mxu0 0.0
    %582 = vmatpush1.msra.mxu0 0.0
    %583 = vmatprep.subr.mxu0 0.0
    %584 = vmatpush1.msra.mxu0 0.0
    %585 = vmatprep.subr.mxu0 0.0
    %586 = vmatpush1.msra.mxu0 0.0
    %587 = vmatprep.subr.mxu0 0.0
    %588 = vmatpush1.msra.mxu0 0.0
    %589 = vmatprep.subr.mxu0 0.0
    %590 = vmatpush1.msra.mxu0 0.0
    %591 = vmatprep.subr.mxu0 0.0
    %592 = vmatpush1.msra.mxu0 0.0
    %593 = vmatprep.mubr.f32.mxu0 0.0
    %594 = vmatmul.mubr.f32.gmra.mrb[0].mxu0 %v505
    %v595 = vpop.f32.mrb[0].mxu0
    %v596 = vadd.f32 %v527, %v595
    %v597 = vpop.f32.mrb[0].mxu0
    %598 = vdwg.mxu0
    %v599 = vmax.f32 %v596, 0.0
    %v600 = vld [vmem:[#allocation13] sm:$0xff]
    %v601 = vld [vmem:[#allocation13 + $0x8] sm:$0xff]
    %v602 = vld [vmem:[#allocation13 + $0x10] sm:$0xff]
    %v603 = vld [vmem:[#allocation13 + $0x18] sm:$0xff]
    %v604 = vld [vmem:[#allocation13 + $0x20] sm:$0xff]
    %v605 = vld [vmem:[#allocation13 + $0x28] sm:$0xff]
    %v606 = vld [vmem:[#allocation13 + $0x30] sm:$0xff]
    %v607 = vld [vmem:[#allocation13 + $0x38] sm:$0xff]
    %v608 = vld [vmem:[#allocation13 + $0x40] sm:$0xff]
    %v609 = vld [vmem:[#allocation13 + $0x48] sm:$0xff]
    %v610 = vld [vmem:[#allocation13 + $0x50] sm:$0xff]
    %v611 = vld [vmem:[#allocation13 + $0x58] sm:$0xff]
    %v612 = vld [vmem:[#allocation13 + $0x60] sm:$0xff]
    %v613 = vld [vmem:[#allocation13 + $0x68] sm:$0xff]
    %v614 = vld [vmem:[#allocation13 + $0x70] sm:$0xff]
    %v615 = vld [vmem:[#allocation13 + $0x78] sm:$0xff]
    %v616 = vld [vmem:[%s12] sm:$0x1]
    %v618 = vlaneseq
    %v619 = vshrl.u32 %v618, 7
    %v620 = vsub.s32 0, %v619
    %v621 = vrot.slane %v616, %v620
    %623 = vmatprep.subr.mxu0 0.0
    %624 = vmatpush1.msra.mxu0 %v600
    %625 = vmatprep.subr.mxu0 0.0
    %626 = vmatpush1.msra.mxu0 %v601
    %627 = vmatprep.subr.mxu0 0.0
    %628 = vmatpush1.msra.mxu0 %v602
    %629 = vmatprep.subr.mxu0 0.0
    %630 = vmatpush1.msra.mxu0 %v603
    %631 = vmatprep.subr.mxu0 0.0
    %632 = vmatpush1.msra.mxu0 %v604
    %633 = vmatprep.subr.mxu0 0.0
    %634 = vmatpush1.msra.mxu0 %v605
    %635 = vmatprep.subr.mxu0 0.0
    %636 = vmatpush1.msra.mxu0 %v606
    %637 = vmatprep.subr.mxu0 0.0
    %638 = vmatpush1.msra.mxu0 %v607
    %639 = vmatprep.subr.mxu0 0.0
    %640 = vmatpush1.msra.mxu0 %v608
    %641 = vmatprep.subr.mxu0 0.0
    %642 = vmatpush1.msra.mxu0 %v609
    %643 = vmatprep.subr.mxu0 0.0
    %644 = vmatpush1.msra.mxu0 %v610
    %645 = vmatprep.subr.mxu0 0.0
    %646 = vmatpush1.msra.mxu0 %v611
    %647 = vmatprep.subr.mxu0 0.0
    %648 = vmatpush1.msra.mxu0 %v612
    %649 = vmatprep.subr.mxu0 0.0
    %650 = vmatpush1.msra.mxu0 %v613
    %651 = vmatprep.subr.mxu0 0.0
    %652 = vmatpush1.msra.mxu0 %v614
    %653 = vmatprep.subr.mxu0 0.0
    %654 = vmatpush1.msra.mxu0 %v615
    %655 = vmatprep.subr.mxu0 0.0
    %656 = vmatpush1.msra.mxu0 0.0
    %657 = vmatprep.subr.mxu0 0.0
    %658 = vmatpush1.msra.mxu0 0.0
    %659 = vmatprep.subr.mxu0 0.0
    %660 = vmatpush1.msra.mxu0 0.0
    %661 = vmatprep.subr.mxu0 0.0
    %662 = vmatpush1.msra.mxu0 0.0
    %663 = vmatprep.subr.mxu0 0.0
    %664 = vmatpush1.msra.mxu0 0.0
    %665 = vmatprep.subr.mxu0 0.0
    %666 = vmatpush1.msra.mxu0 0.0
    %667 = vmatprep.subr.mxu0 0.0
    %668 = vmatpush1.msra.mxu0 0.0
    %669 = vmatprep.subr.mxu0 0.0
    %670 = vmatpush1.msra.mxu0 0.0
    %671 = vmatprep.subr.mxu0 0.0
    %672 = vmatpush1.msra.mxu0 0.0
    %673 = vmatprep.subr.mxu0 0.0
    %674 = vmatpush1.msra.mxu0 0.0
    %675 = vmatprep.subr.mxu0 0.0
    %676 = vmatpush1.msra.mxu0 0.0
    %677 = vmatprep.subr.mxu0 0.0
    %678 = vmatpush1.msra.mxu0 0.0
    %679 = vmatprep.subr.mxu0 0.0
    %680 = vmatpush1.msra.mxu0 0.0
    %681 = vmatprep.subr.mxu0 0.0
    %682 = vmatpush1.msra.mxu0 0.0
    %683 = vmatprep.subr.mxu0 0.0
    %684 = vmatpush1.msra.mxu0 0.0
    %685 = vmatprep.subr.mxu0 0.0
    %686 = vmatpush1.msra.mxu0 0.0
    %687 = vmatprep.mubr.f32.mxu0 0.0
    %688 = vmatmul.mubr.f32.gmra.mrb[0].mxu0 %v599
    %v689 = vpop.f32.mrb[0].mxu0
    %v690 = vadd.f32 %v621, %v689
    %v691 = vpop.f32.mrb[0].mxu0
    %692 = vdwg.mxu0
    %v693 = vmax.f32 %v690, 0.0
    %694 = vst [vmem:[#allocation14] sm:$0xff] %v693
    // Predicated region
    $region82: #{sdae_forward.1} parent=1 // pred_check
      _
    $region83: #{sdae_forward.1} parent=1 // pred_check_branch
      %696 = sbr.rel (0) target = $region85
    $region84: #{sdae_forward.1} parent=1 // pred_region
      %s698 = ssub.s32 128, 128
      %699 = vsyncadd [#allocation4], %s698
      %s701 = sshll.u32 [#allocation14], 4
      %s702 = int_to_ptr.vmem [resolvable:$true] %s701
      %704 = dma.vmem_to_hbm [thread:$0]  %s702, 128, %s13, [#allocation4]
    $region85: #{sdae_forward.1} parent=1 // pred_fallthru
      _
    // Predicated region
    $region86: #{sdae_forward.1} parent=1 // pred_check
      _
    $region87: #{sdae_forward.1} parent=1 // pred_check_branch
      %706 = sbr.rel (0) target = $region89
    $region88: #{sdae_forward.1} parent=1 // pred_region
      %707 = dma.done [#allocation4], 128
    $region89: #{sdae_forward.1} parent=1 // pred_fallthru
      _
    %708 = vsyncpa [#allocation3], 1
    %709 = vsyncpa [#allocation6], 1
    %710 = vsyncpa [#allocation9], 1
    %711 = vsyncpa [#allocation12], 1
    %712 = vsyncpa [#allocation4], 1

</llo_original>
